<compile_context>
chip_gen: v5e
topology: v5e:2x2
jax: 0.10.0
libtpu: 0.0.40
codegen_flags: <defaults>
</compile_context>

<pallas_src>
import math
import functools

import jax
import jax.numpy as jnp
from jax import lax
from jax.experimental import pallas as pl
from jax.experimental.pallas import tpu as pltpu


def _layer_norm(x, gamma, beta, eps=1e-5):
    mean = jnp.mean(x, axis=-1, keepdims=True)
    var = jnp.mean((x - mean) ** 2, axis=-1, keepdims=True)
    return (x - mean) * lax.rsqrt(var + eps) * gamma + beta


def _encoder_layer_kernel(
    src_ref, pos_ref,
    in_w_t_ref, in_b_ref,      # (D, 3D) bf16, (1, 3D) f32   (Wq/bq pre-scaled by 1/sqrt(dh))
    out_w_t_ref, out_b_ref,    # (D, D)  bf16, (1, D)  f32
    w1_t_ref, b1_ref,          # (D, F)  bf16, (1, F)  f32
    w2_t_ref, b2_ref,          # (F, D)  bf16, (1, D)  f32
    g1_ref, bt1_ref,           # (1, D) f32
    g2_ref, bt2_ref,           # (1, D) f32
    o_ref,                     # (Bt, S, D)
    *, d_model, nhead,
):
    D = d_model
    H = nhead
    dh = D // H
    Bt, S, _ = src_ref.shape
    N = Bt * S

    x = src_ref[...].astype(jnp.float32)                 # (Bt, S, D)
    qk_in = x + pos_ref[...].astype(jnp.float32)

    # Work in 2-D (Bt*S, D); leading-dim reshapes are pure shape casts when S % 8 == 0.
    x2d = x.reshape(N, D)
    qk2d_bf = qk_in.reshape(N, D).astype(jnp.bfloat16)
    x2d_bf = x2d.astype(jnp.bfloat16)

    in_w_t = in_w_t_ref[...]                             # (D, 3D) bf16
    in_b = in_b_ref[...]                                 # (1, 3D) f32

    # Fused Q+K projection (same src+pos input); V projected from src alone.
    qk = jnp.dot(qk2d_bf, in_w_t[:, :2 * D], preferred_element_type=jnp.float32)
    q = qk[:, :D] + in_b[:, :D]                          # 1/sqrt(dh) already folded into Wq, bq
    k = qk[:, D:] + in_b[:, D:2 * D]
    v = jnp.dot(x2d_bf, in_w_t[:, 2 * D:],
                preferred_element_type=jnp.float32) + in_b[:, 2 * D:]

    # Head split: (Bt*S, D) -> (H*Bt, S, dh) with head-major batch ordering.
    def split_heads(t2d):
        return jnp.concatenate(
            [t2d[:, h * dh:(h + 1) * dh].reshape(Bt, S, dh) for h in range(H)],
            axis=0).astype(jnp.bfloat16)

    qh = split_heads(q)                                   # (H*Bt, S, dh) bf16
    kh = split_heads(k)
    vh = split_heads(v)

    # Single batched MXU matmul for every (head, batch) pair.
    s = jnp.einsum('gqd,gkd->gqk', qh, kh,
                   preferred_element_type=jnp.float32)    # (H*Bt, S, S) f32
    s = s - jnp.max(s, axis=-1, keepdims=True)
    e = jnp.exp(s)
    p = e * pl.reciprocal(jnp.sum(e, axis=-1, keepdims=True), approx=True)
    o = jnp.einsum('gqk,gkd->gqd', p.astype(jnp.bfloat16), vh,
                   preferred_element_type=jnp.float32)    # (H*Bt, S, dh) f32

    # Merge heads back to (Bt*S, D).
    attn = jnp.concatenate(
        [o[h * Bt:(h + 1) * Bt].reshape(N, dh) for h in range(H)], axis=-1)

    attn = jnp.dot(attn.astype(jnp.bfloat16), out_w_t_ref[...],
                   preferred_element_type=jnp.float32) + out_b_ref[...]

    # Residual + norm1 (dropout1 = identity in eval).
    x1 = _layer_norm(x2d + attn, g1_ref[...], bt1_ref[...])

    # FFN: linear1 -> relu -> linear2 (dropout = identity in eval).
    h1 = jnp.dot(x1.astype(jnp.bfloat16), w1_t_ref[...],
                 preferred_element_type=jnp.float32) + b1_ref[...]
    h1 = jnp.maximum(h1, 0.0)
    ffn = jnp.dot(h1.astype(jnp.bfloat16), w2_t_ref[...],
                  preferred_element_type=jnp.float32) + b2_ref[...]

    # Residual + norm2 (dropout2 = identity in eval).
    x2 = _layer_norm(x1 + ffn, g2_ref[...], bt2_ref[...])

    o_ref[...] = x2.reshape(Bt, S, D).astype(o_ref.dtype)


def transformer_encoder_layer(src_sbd, pos_sbd, params, *, d_model, nhead, batch_tile=1):
    """src_sbd, pos_sbd: (S, B, D) float32, PyTorch layout. Returns (S, B, D) float32."""
    S, B, D = src_sbd.shape
    F = params["w1"].shape[0]
    assert D == d_model and D % nhead == 0
    assert B % batch_tile == 0
    dh = D // nhead

    # (S, B, D) -> (B, S, D): keeps full-extent (S, D) trailing block dims per grid step.
    src = jnp.transpose(src_sbd, (1, 0, 2))
    pos = jnp.transpose(pos_sbd, (1, 0, 2))

    # Fold the attention scale into the Q projection (weights + bias).
    qk_scale = 1.0 / math.sqrt(dh)
    in_w = jnp.concatenate([params["in_proj_w"][:D] * qk_scale,
                            params["in_proj_w"][D:]], axis=0)
    in_b = jnp.concatenate([params["in_proj_b"][:D] * qk_scale,
                            params["in_proj_b"][D:]], axis=0)

    # Pre-transpose Linear weights (kernel does x @ W_T) and cast to bf16 for the MXU.
    in_w_t = in_w.T.astype(jnp.bfloat16)                     # (D, 3D)
    in_b2 = in_b.reshape(1, 3 * D).astype(jnp.float32)
    out_w_t = params["out_proj_w"].T.astype(jnp.bfloat16)    # (D, D)
    out_b = params["out_proj_b"].reshape(1, D).astype(jnp.float32)
    w1_t = params["w1"].T.astype(jnp.bfloat16)               # (D, F)
    b1 = params["b1"].reshape(1, F).astype(jnp.float32)
    w2_t = params["w2"].T.astype(jnp.bfloat16)               # (F, D)
    b2 = params["b2"].reshape(1, D).astype(jnp.float32)
    g1 = params["g1"].reshape(1, D).astype(jnp.float32)
    bt1 = params["bt1"].reshape(1, D).astype(jnp.float32)
    g2 = params["g2"].reshape(1, D).astype(jnp.float32)
    bt2 = params["bt2"].reshape(1, D).astype(jnp.float32)

    def full2d(shape):
        return pl.BlockSpec(shape, lambda b: (0, 0))

    per_batch = pl.BlockSpec((batch_tile, S, D), lambda b: (b, 0, 0))

    kernel = functools.partial(_encoder_layer_kernel, d_model=D, nhead=nhead)

    out = pl.pallas_call(
        kernel,
        out_shape=jax.ShapeDtypeStruct((B, S, D), src.dtype),
        grid_spec=pltpu.PrefetchScalarGridSpec(
            num_scalar_prefetch=0,
            grid=(B // batch_tile,),
            in_specs=[
                per_batch,                 # src
                per_batch,                 # pos
                full2d((D, 3 * D)), full2d((1, 3 * D)),
                full2d((D, D)), full2d((1, D)),
                full2d((D, F)), full2d((1, F)),
                full2d((F, D)), full2d((1, D)),
                full2d((1, D)), full2d((1, D)),
                full2d((1, D)), full2d((1, D)),
            ],
            out_specs=per_batch,
        ),
        compiler_params=pltpu.CompilerParams(
            dimension_semantics=("parallel",),     # batch steps independent -> megacore / v7x 2 TCs
            vmem_limit_bytes=32 * 1024 * 1024,
        ),
    )(src, pos, in_w_t, in_b2, out_w_t, out_b, w1_t, b1, w2_t, b2,
      g1, bt1, g2, bt2)

    return jnp.transpose(out, (1, 0, 2))           # back to (S, B, D)


def _reference(src_sbd, pos_sbd, params, *, d_model, nhead):
    """Pure-JAX f32 reference matching PyTorch forward_post semantics (eval mode)."""
    S, B, D = src_sbd.shape
    dh = D // nhead
    x = jnp.transpose(src_sbd, (1, 0, 2))
    p = jnp.transpose(pos_sbd, (1, 0, 2))
    qk = x + p
    Wi, bi = params["in_proj_w"], params["in_proj_b"]
    q = qk @ Wi[:D].T + bi[:D]
    k = qk @ Wi[D:2 * D].T + bi[D:2 * D]
    v = x @ Wi[2 * D:].T + bi[2 * D:]

    def heads(t):  # (B, S, D) -> (B, H, S, dh)
        return jnp.transpose(t.reshape(B, S, nhead, dh), (0, 2, 1, 3))

    qh, kh, vh = heads(q) / math.sqrt(dh), heads(k), heads(v)
    s = jnp.einsum("bhqd,bhkd->bhqk", qh, kh)
    w = jax.nn.softmax(s, axis=-1)
    o = jnp.einsum("bhqk,bhkd->bhqd", w, vh)
    o = jnp.transpose(o, (0, 2, 1, 3)).reshape(B, S, D)
    attn = o @ params["out_proj_w"].T + params["out_proj_b"]

    def ln(t, g, b, eps=1e-5):
        m = t.mean(-1, keepdims=True)
        var = ((t - m) ** 2).mean(-1, keepdims=True)
        return (t - m) / jnp.sqrt(var + eps) * g + b

    x1 = ln(x + attn, params["g1"], params["bt1"])
    ffn = jnp.maximum(x1 @ params["w1"].T + params["b1"], 0.0) @ params["w2"].T + params["b2"]
    x2 = ln(x1 + ffn, params["g2"], params["bt2"])
    return jnp.transpose(x2, (1, 0, 2))


if __name__ == "__main__":
    S, B, D, H, F = 8, 2, 32, 4, 64   # seq, batch, d_model, nhead, dim_feedforward

    key = jax.random.PRNGKey(0)
    keys = jax.random.split(key, 12)
    scale = 0.1
    params = {
        "in_proj_w": scale * jax.random.normal(keys[0], (3 * D, D), jnp.float32),
        "in_proj_b": scale * jax.random.normal(keys[1], (3 * D,), jnp.float32),
        "out_proj_w": scale * jax.random.normal(keys[2], (D, D), jnp.float32),
        "out_proj_b": scale * jax.random.normal(keys[3], (D,), jnp.float32),
        "w1": scale * jax.random.normal(keys[4], (F, D), jnp.float32),
        "b1": scale * jax.random.normal(keys[5], (F,), jnp.float32),
        "w2": scale * jax.random.normal(keys[6], (D, F), jnp.float32),
        "b2": scale * jax.random.normal(keys[7], (D,), jnp.float32),
        "g1": jnp.ones((D,), jnp.float32),
        "bt1": jnp.zeros((D,), jnp.float32),
        "g2": jnp.ones((D,), jnp.float32),
        "bt2": jnp.zeros((D,), jnp.float32),
    }

    src = jax.random.normal(keys[8], (S, B, D), jnp.float32)
    pos = jax.random.normal(keys[9], (S, B, D), jnp.float32)

    ref = _reference(src, pos, params, d_model=D, nhead=H)

    # Tolerance reflects bf16 MXU operands (f32 accumulation) vs the f32 reference.
    for bt in (1, 2):
        out = transformer_encoder_layer(src, pos, params, d_model=D, nhead=H, batch_tile=bt)
        out = jax.block_until_ready(out)
        assert out.shape == (S, B, D)
        err = float(jnp.max(jnp.abs(out - ref)))
        assert jnp.allclose(out, ref, atol=2e-2, rtol=2e-2), err

    print("KERNEL_OK")
</pallas_src>

<mosaic_0001>
module attributes {stable_mosaic.version = 11 : i64} {
  func.func @_encoder_layer_kernel(%arg0: i32, %arg1: memref<1x8x32xf32, #tpu.memory_space<vmem>>, %arg2: memref<1x8x32xf32, #tpu.memory_space<vmem>>, %arg3: memref<32x96xbf16, #tpu.memory_space<vmem>>, %arg4: memref<1x96xf32, #tpu.memory_space<vmem>>, %arg5: memref<32x32xbf16, #tpu.memory_space<vmem>>, %arg6: memref<1x32xf32, #tpu.memory_space<vmem>>, %arg7: memref<32x64xbf16, #tpu.memory_space<vmem>>, %arg8: memref<1x64xf32, #tpu.memory_space<vmem>>, %arg9: memref<64x32xbf16, #tpu.memory_space<vmem>>, %arg10: memref<1x32xf32, #tpu.memory_space<vmem>>, %arg11: memref<1x32xf32, #tpu.memory_space<vmem>>, %arg12: memref<1x32xf32, #tpu.memory_space<vmem>>, %arg13: memref<1x32xf32, #tpu.memory_space<vmem>>, %arg14: memref<1x32xf32, #tpu.memory_space<vmem>>, %arg15: memref<1x8x32xf32, #tpu.memory_space<vmem>>) attributes {dimension_semantics = [#tpu.dimension_semantics<parallel>], iteration_bounds = array<i64: 2>, scalar_prefetch = 0 : i64, scratch_operands = 0 : i64, tpu.core_type = #tpu.core_type<tc>, window_params = [{transform_indices = @transform_0, window_bounds = array<i64: 1, 8, 32>}, {transform_indices = @transform_1, window_bounds = array<i64: 1, 8, 32>}, {pipeline_mode = #tpu.pipeline_mode<synchronous>, transform_indices = @transform_2, window_bounds = array<i64: 32, 96>}, {pipeline_mode = #tpu.pipeline_mode<synchronous>, transform_indices = @transform_3, window_bounds = array<i64: 1, 96>}, {pipeline_mode = #tpu.pipeline_mode<synchronous>, transform_indices = @transform_4, window_bounds = array<i64: 32, 32>}, {pipeline_mode = #tpu.pipeline_mode<synchronous>, transform_indices = @transform_5, window_bounds = array<i64: 1, 32>}, {pipeline_mode = #tpu.pipeline_mode<synchronous>, transform_indices = @transform_6, window_bounds = array<i64: 32, 64>}, {pipeline_mode = #tpu.pipeline_mode<synchronous>, transform_indices = @transform_7, window_bounds = array<i64: 1, 64>}, {pipeline_mode = #tpu.pipeline_mode<synchronous>, transform_indices = @transform_8, window_bounds = array<i64: 64, 32>}, {pipeline_mode = #tpu.pipeline_mode<synchronous>, transform_indices = @transform_9, window_bounds = array<i64: 1, 32>}, {pipeline_mode = #tpu.pipeline_mode<synchronous>, transform_indices = @transform_10, window_bounds = array<i64: 1, 32>}, {pipeline_mode = #tpu.pipeline_mode<synchronous>, transform_indices = @transform_11, window_bounds = array<i64: 1, 32>}, {pipeline_mode = #tpu.pipeline_mode<synchronous>, transform_indices = @transform_12, window_bounds = array<i64: 1, 32>}, {pipeline_mode = #tpu.pipeline_mode<synchronous>, transform_indices = @transform_13, window_bounds = array<i64: 1, 32>}, {transform_indices = @transform_14, window_bounds = array<i64: 1, 8, 32>}]} {
    %c0 = arith.constant 0 : index
    %c0_0 = arith.constant 0 : index
    %c0_1 = arith.constant 0 : index
    %0 = vector.load %arg1[%c0, %c0_0, %c0_1] : memref<1x8x32xf32, #tpu.memory_space<vmem>>, vector<1x8x32xf32>
    %c0_2 = arith.constant 0 : index
    %c0_3 = arith.constant 0 : index
    %c0_4 = arith.constant 0 : index
    %1 = vector.load %arg2[%c0_2, %c0_3, %c0_4] : memref<1x8x32xf32, #tpu.memory_space<vmem>>, vector<1x8x32xf32>
    %2 = arith.addf %0, %1 : vector<1x8x32xf32>
    %3 = vector.shape_cast %0 : vector<1x8x32xf32> to vector<8x32xf32>
    %4 = vector.shape_cast %2 : vector<1x8x32xf32> to vector<8x32xf32>
    %5 = arith.truncf %4 : vector<8x32xf32> to vector<8x32xbf16>
    %6 = arith.truncf %3 : vector<8x32xf32> to vector<8x32xbf16>
    %c0_5 = arith.constant 0 : index
    %c0_6 = arith.constant 0 : index
    %7 = vector.load %arg3[%c0_5, %c0_6] : memref<32x96xbf16, #tpu.memory_space<vmem>>, vector<32x96xbf16>
    %c0_7 = arith.constant 0 : index
    %c0_8 = arith.constant 0 : index
    %8 = vector.load %arg4[%c0_7, %c0_8] : memref<1x96xf32, #tpu.memory_space<vmem>>, vector<1x96xf32>
    %9 = vector.extract_strided_slice %7 {offsets = [0, 0], sizes = [32, 64], strides = [1, 1]} : vector<32x96xbf16> to vector<32x64xbf16>
    %cst = arith.constant dense<0.000000e+00> : vector<8x64xf32>
    %10 = tpu.matmul %5, %9, %cst {dimension_numbers = #tpu.dot_dimension_numbers<[1], [0], [0], [1], [0, 0, 1, 1], [], []>} : vector<8x32xbf16>, vector<32x64xbf16>, vector<8x64xf32> -> vector<8x64xf32>
    %11 = vector.extract_strided_slice %10 {offsets = [0, 0], sizes = [8, 32], strides = [1, 1]} : vector<8x64xf32> to vector<8x32xf32>
    %12 = vector.extract_strided_slice %8 {offsets = [0, 0], sizes = [1, 32], strides = [1, 1]} : vector<1x96xf32> to vector<1x32xf32>
    %13 = vector.broadcast %12 : vector<1x32xf32> to vector<8x32xf32>
    %14 = arith.addf %11, %13 : vector<8x32xf32>
    %15 = vector.extract_strided_slice %10 {offsets = [0, 32], sizes = [8, 32], strides = [1, 1]} : vector<8x64xf32> to vector<8x32xf32>
    %16 = vector.extract_strided_slice %8 {offsets = [0, 32], sizes = [1, 32], strides = [1, 1]} : vector<1x96xf32> to vector<1x32xf32>
    %17 = vector.broadcast %16 : vector<1x32xf32> to vector<8x32xf32>
    %18 = arith.addf %15, %17 : vector<8x32xf32>
    %19 = vector.extract_strided_slice %7 {offsets = [0, 64], sizes = [32, 32], strides = [1, 1]} : vector<32x96xbf16> to vector<32x32xbf16>
    %cst_9 = arith.constant dense<0.000000e+00> : vector<8x32xf32>
    %20 = tpu.matmul %6, %19, %cst_9 {dimension_numbers = #tpu.dot_dimension_numbers<[1], [0], [0], [1], [0, 0, 1, 1], [], []>} : vector<8x32xbf16>, vector<32x32xbf16>, vector<8x32xf32> -> vector<8x32xf32>
    %21 = vector.extract_strided_slice %8 {offsets = [0, 64], sizes = [1, 32], strides = [1, 1]} : vector<1x96xf32> to vector<1x32xf32>
    %22 = vector.broadcast %21 : vector<1x32xf32> to vector<8x32xf32>
    %23 = arith.addf %20, %22 : vector<8x32xf32>
    %24 = vector.extract_strided_slice %14 {offsets = [0, 0], sizes = [8, 8], strides = [1, 1]} : vector<8x32xf32> to vector<8x8xf32>
    %25 = vector.shape_cast %24 : vector<8x8xf32> to vector<1x8x8xf32>
    %26 = vector.extract_strided_slice %14 {offsets = [0, 8], sizes = [8, 8], strides = [1, 1]} : vector<8x32xf32> to vector<8x8xf32>
    %27 = vector.shape_cast %26 : vector<8x8xf32> to vector<1x8x8xf32>
    %28 = vector.extract_strided_slice %14 {offsets = [0, 16], sizes = [8, 8], strides = [1, 1]} : vector<8x32xf32> to vector<8x8xf32>
    %29 = vector.shape_cast %28 : vector<8x8xf32> to vector<1x8x8xf32>
    %30 = vector.extract_strided_slice %14 {offsets = [0, 24], sizes = [8, 8], strides = [1, 1]} : vector<8x32xf32> to vector<8x8xf32>
    %31 = vector.shape_cast %30 : vector<8x8xf32> to vector<1x8x8xf32>
    %32 = tpu.concatenate %25, %27, %29, %31 in 0 : vector<1x8x8xf32>, vector<1x8x8xf32>, vector<1x8x8xf32>, vector<1x8x8xf32> -> vector<4x8x8xf32>
    %33 = arith.truncf %32 : vector<4x8x8xf32> to vector<4x8x8xbf16>
    %34 = vector.extract_strided_slice %18 {offsets = [0, 0], sizes = [8, 8], strides = [1, 1]} : vector<8x32xf32> to vector<8x8xf32>
    %35 = vector.shape_cast %34 : vector<8x8xf32> to vector<1x8x8xf32>
    %36 = vector.extract_strided_slice %18 {offsets = [0, 8], sizes = [8, 8], strides = [1, 1]} : vector<8x32xf32> to vector<8x8xf32>
    %37 = vector.shape_cast %36 : vector<8x8xf32> to vector<1x8x8xf32>
    %38 = vector.extract_strided_slice %18 {offsets = [0, 16], sizes = [8, 8], strides = [1, 1]} : vector<8x32xf32> to vector<8x8xf32>
    %39 = vector.shape_cast %38 : vector<8x8xf32> to vector<1x8x8xf32>
    %40 = vector.extract_strided_slice %18 {offsets = [0, 24], sizes = [8, 8], strides = [1, 1]} : vector<8x32xf32> to vector<8x8xf32>
    %41 = vector.shape_cast %40 : vector<8x8xf32> to vector<1x8x8xf32>
    %42 = tpu.concatenate %35, %37, %39, %41 in 0 : vector<1x8x8xf32>, vector<1x8x8xf32>, vector<1x8x8xf32>, vector<1x8x8xf32> -> vector<4x8x8xf32>
    %43 = arith.truncf %42 : vector<4x8x8xf32> to vector<4x8x8xbf16>
    %44 = vector.extract_strided_slice %23 {offsets = [0, 0], sizes = [8, 8], strides = [1, 1]} : vector<8x32xf32> to vector<8x8xf32>
    %45 = vector.shape_cast %44 : vector<8x8xf32> to vector<1x8x8xf32>
    %46 = vector.extract_strided_slice %23 {offsets = [0, 8], sizes = [8, 8], strides = [1, 1]} : vector<8x32xf32> to vector<8x8xf32>
    %47 = vector.shape_cast %46 : vector<8x8xf32> to vector<1x8x8xf32>
    %48 = vector.extract_strided_slice %23 {offsets = [0, 16], sizes = [8, 8], strides = [1, 1]} : vector<8x32xf32> to vector<8x8xf32>
    %49 = vector.shape_cast %48 : vector<8x8xf32> to vector<1x8x8xf32>
    %50 = vector.extract_strided_slice %23 {offsets = [0, 24], sizes = [8, 8], strides = [1, 1]} : vector<8x32xf32> to vector<8x8xf32>
    %51 = vector.shape_cast %50 : vector<8x8xf32> to vector<1x8x8xf32>
    %52 = tpu.concatenate %45, %47, %49, %51 in 0 : vector<1x8x8xf32>, vector<1x8x8xf32>, vector<1x8x8xf32>, vector<1x8x8xf32> -> vector<4x8x8xf32>
    %53 = arith.truncf %52 : vector<4x8x8xf32> to vector<4x8x8xbf16>
    "tpu.trace_start"() <{level = 10 : i32, message = "gqd,gkd->gqk"}> : () -> ()
    %cst_10 = arith.constant dense<0.000000e+00> : vector<4x8x8xf32>
    %54 = tpu.matmul %33, %43, %cst_10 {dimension_numbers = #tpu.dot_dimension_numbers<[2], [2], [1], [1], [0, 0, 0, 1, 1, 1], [0], [0]>} : vector<4x8x8xbf16>, vector<4x8x8xbf16>, vector<4x8x8xf32> -> vector<4x8x8xf32>
    "tpu.trace_stop"() : () -> ()
    %cst_11 = arith.constant dense<0xFF800000> : vector<4x8xf32>
    %55 = vector.multi_reduction <maximumf>, %54, %cst_11 [2] : vector<4x8x8xf32> to vector<4x8xf32>
    %56 = vector.shape_cast %55 : vector<4x8xf32> to vector<4x8x1xf32>
    %57 = vector.broadcast %56 : vector<4x8x1xf32> to vector<4x8x8xf32>
    %58 = arith.subf %54, %57 : vector<4x8x8xf32>
    %59 = math.exp %58 : vector<4x8x8xf32>
    %cst_12 = arith.constant dense<0.000000e+00> : vector<4x8xf32>
    %60 = vector.multi_reduction <add>, %59, %cst_12 [2] : vector<4x8x8xf32> to vector<4x8xf32>
    %61 = vector.shape_cast %60 : vector<4x8xf32> to vector<4x8x1xf32>
    %62 = tpu.reciprocal %61 {approx = true} : vector<4x8x1xf32> -> vector<4x8x1xf32>
    %63 = vector.broadcast %62 : vector<4x8x1xf32> to vector<4x8x8xf32>
    %64 = arith.mulf %59, %63 : vector<4x8x8xf32>
    %65 = arith.truncf %64 : vector<4x8x8xf32> to vector<4x8x8xbf16>
    "tpu.trace_start"() <{level = 10 : i32, message = "gqk,gkd->gqd"}> : () -> ()
    %cst_13 = arith.constant dense<0.000000e+00> : vector<4x8x8xf32>
    %66 = tpu.matmul %65, %53, %cst_13 {dimension_numbers = #tpu.dot_dimension_numbers<[2], [1], [1], [2], [0, 0, 0, 1, 1, 2], [0], [0]>} : vector<4x8x8xbf16>, vector<4x8x8xbf16>, vector<4x8x8xf32> -> vector<4x8x8xf32>
    "tpu.trace_stop"() : () -> ()
    %67 = vector.extract_strided_slice %66 {offsets = [0, 0, 0], sizes = [1, 8, 8], strides = [1, 1, 1]} : vector<4x8x8xf32> to vector<1x8x8xf32>
    %68 = vector.shape_cast %67 : vector<1x8x8xf32> to vector<8x8xf32>
    %69 = vector.extract_strided_slice %66 {offsets = [1, 0, 0], sizes = [1, 8, 8], strides = [1, 1, 1]} : vector<4x8x8xf32> to vector<1x8x8xf32>
    %70 = vector.shape_cast %69 : vector<1x8x8xf32> to vector<8x8xf32>
    %71 = vector.extract_strided_slice %66 {offsets = [2, 0, 0], sizes = [1, 8, 8], strides = [1, 1, 1]} : vector<4x8x8xf32> to vector<1x8x8xf32>
    %72 = vector.shape_cast %71 : vector<1x8x8xf32> to vector<8x8xf32>
    %73 = vector.extract_strided_slice %66 {offsets = [3, 0, 0], sizes = [1, 8, 8], strides = [1, 1, 1]} : vector<4x8x8xf32> to vector<1x8x8xf32>
    %74 = vector.shape_cast %73 : vector<1x8x8xf32> to vector<8x8xf32>
    %75 = tpu.concatenate %68, %70, %72, %74 in 1 : vector<8x8xf32>, vector<8x8xf32>, vector<8x8xf32>, vector<8x8xf32> -> vector<8x32xf32>
    %76 = arith.truncf %75 : vector<8x32xf32> to vector<8x32xbf16>
    %c0_14 = arith.constant 0 : index
    %c0_15 = arith.constant 0 : index
    %77 = vector.load %arg5[%c0_14, %c0_15] : memref<32x32xbf16, #tpu.memory_space<vmem>>, vector<32x32xbf16>
    %cst_16 = arith.constant dense<0.000000e+00> : vector<8x32xf32>
    %78 = tpu.matmul %76, %77, %cst_16 {dimension_numbers = #tpu.dot_dimension_numbers<[1], [0], [0], [1], [0, 0, 1, 1], [], []>} : vector<8x32xbf16>, vector<32x32xbf16>, vector<8x32xf32> -> vector<8x32xf32>
    %c0_17 = arith.constant 0 : index
    %c0_18 = arith.constant 0 : index
    %79 = vector.load %arg6[%c0_17, %c0_18] : memref<1x32xf32, #tpu.memory_space<vmem>>, vector<1x32xf32>
    %80 = vector.broadcast %79 : vector<1x32xf32> to vector<8x32xf32>
    %81 = arith.addf %78, %80 : vector<8x32xf32>
    %82 = arith.addf %3, %81 : vector<8x32xf32>
    %c0_19 = arith.constant 0 : index
    %c0_20 = arith.constant 0 : index
    %83 = vector.load %arg11[%c0_19, %c0_20] : memref<1x32xf32, #tpu.memory_space<vmem>>, vector<1x32xf32>
    %c0_21 = arith.constant 0 : index
    %c0_22 = arith.constant 0 : index
    %84 = vector.load %arg12[%c0_21, %c0_22] : memref<1x32xf32, #tpu.memory_space<vmem>>, vector<1x32xf32>
    %cst_23 = arith.constant dense<0.000000e+00> : vector<8xf32>
    %85 = vector.multi_reduction <add>, %82, %cst_23 [1] : vector<8x32xf32> to vector<8xf32>
    %86 = vector.shape_cast %85 : vector<8xf32> to vector<8x1xf32>
    %cst_24 = arith.constant 3.200000e+01 : f32
    %87 = vector.broadcast %cst_24 : f32 to vector<8x1xf32>
    %88 = arith.divf %86, %87 : vector<8x1xf32>
    %89 = vector.broadcast %88 : vector<8x1xf32> to vector<8x32xf32>
    %90 = arith.subf %82, %89 : vector<8x32xf32>
    %91 = arith.mulf %90, %90 : vector<8x32xf32>
    %cst_25 = arith.constant dense<0.000000e+00> : vector<8xf32>
    %92 = vector.multi_reduction <add>, %91, %cst_25 [1] : vector<8x32xf32> to vector<8xf32>
    %93 = vector.shape_cast %92 : vector<8xf32> to vector<8x1xf32>
    %cst_26 = arith.constant 3.200000e+01 : f32
    %94 = vector.broadcast %cst_26 : f32 to vector<8x1xf32>
    %95 = arith.divf %93, %94 : vector<8x1xf32>
    %96 = vector.broadcast %88 : vector<8x1xf32> to vector<8x32xf32>
    %97 = arith.subf %82, %96 : vector<8x32xf32>
    %cst_27 = arith.constant 9.99999974E-6 : f32
    %98 = vector.broadcast %cst_27 : f32 to vector<8x1xf32>
    %99 = arith.addf %95, %98 : vector<8x1xf32>
    %100 = math.rsqrt %99 : vector<8x1xf32>
    %101 = vector.broadcast %100 : vector<8x1xf32> to vector<8x32xf32>
    %102 = arith.mulf %97, %101 : vector<8x32xf32>
    %103 = vector.broadcast %83 : vector<1x32xf32> to vector<8x32xf32>
    %104 = arith.mulf %102, %103 : vector<8x32xf32>
    %105 = vector.broadcast %84 : vector<1x32xf32> to vector<8x32xf32>
    %106 = arith.addf %104, %105 : vector<8x32xf32>
    %107 = arith.truncf %106 : vector<8x32xf32> to vector<8x32xbf16>
    %c0_28 = arith.constant 0 : index
    %c0_29 = arith.constant 0 : index
    %108 = vector.load %arg7[%c0_28, %c0_29] : memref<32x64xbf16, #tpu.memory_space<vmem>>, vector<32x64xbf16>
    %cst_30 = arith.constant dense<0.000000e+00> : vector<8x64xf32>
    %109 = tpu.matmul %107, %108, %cst_30 {dimension_numbers = #tpu.dot_dimension_numbers<[1], [0], [0], [1], [0, 0, 1, 1], [], []>} : vector<8x32xbf16>, vector<32x64xbf16>, vector<8x64xf32> -> vector<8x64xf32>
    %c0_31 = arith.constant 0 : index
    %c0_32 = arith.constant 0 : index
    %110 = vector.load %arg8[%c0_31, %c0_32] : memref<1x64xf32, #tpu.memory_space<vmem>>, vector<1x64xf32>
    %111 = vector.broadcast %110 : vector<1x64xf32> to vector<8x64xf32>
    %112 = arith.addf %109, %111 : vector<8x64xf32>
    %cst_33 = arith.constant 0.000000e+00 : f32
    %113 = vector.broadcast %cst_33 : f32 to vector<8x64xf32>
    %114 = arith.maximumf %112, %113 : vector<8x64xf32>
    %115 = arith.truncf %114 : vector<8x64xf32> to vector<8x64xbf16>
    %c0_34 = arith.constant 0 : index
    %c0_35 = arith.constant 0 : index
    %116 = vector.load %arg9[%c0_34, %c0_35] : memref<64x32xbf16, #tpu.memory_space<vmem>>, vector<64x32xbf16>
    %cst_36 = arith.constant dense<0.000000e+00> : vector<8x32xf32>
    %117 = tpu.matmul %115, %116, %cst_36 {dimension_numbers = #tpu.dot_dimension_numbers<[1], [0], [0], [1], [0, 0, 1, 1], [], []>} : vector<8x64xbf16>, vector<64x32xbf16>, vector<8x32xf32> -> vector<8x32xf32>
    %c0_37 = arith.constant 0 : index
    %c0_38 = arith.constant 0 : index
    %118 = vector.load %arg10[%c0_37, %c0_38] : memref<1x32xf32, #tpu.memory_space<vmem>>, vector<1x32xf32>
    %119 = vector.broadcast %118 : vector<1x32xf32> to vector<8x32xf32>
    %120 = arith.addf %117, %119 : vector<8x32xf32>
    %121 = arith.addf %106, %120 : vector<8x32xf32>
    %c0_39 = arith.constant 0 : index
    %c0_40 = arith.constant 0 : index
    %122 = vector.load %arg13[%c0_39, %c0_40] : memref<1x32xf32, #tpu.memory_space<vmem>>, vector<1x32xf32>
    %c0_41 = arith.constant 0 : index
    %c0_42 = arith.constant 0 : index
    %123 = vector.load %arg14[%c0_41, %c0_42] : memref<1x32xf32, #tpu.memory_space<vmem>>, vector<1x32xf32>
    %cst_43 = arith.constant dense<0.000000e+00> : vector<8xf32>
    %124 = vector.multi_reduction <add>, %121, %cst_43 [1] : vector<8x32xf32> to vector<8xf32>
    %125 = vector.shape_cast %124 : vector<8xf32> to vector<8x1xf32>
    %cst_44 = arith.constant 3.200000e+01 : f32
    %126 = vector.broadcast %cst_44 : f32 to vector<8x1xf32>
    %127 = arith.divf %125, %126 : vector<8x1xf32>
    %128 = vector.broadcast %127 : vector<8x1xf32> to vector<8x32xf32>
    %129 = arith.subf %121, %128 : vector<8x32xf32>
    %130 = arith.mulf %129, %129 : vector<8x32xf32>
    %cst_45 = arith.constant dense<0.000000e+00> : vector<8xf32>
    %131 = vector.multi_reduction <add>, %130, %cst_45 [1] : vector<8x32xf32> to vector<8xf32>
    %132 = vector.shape_cast %131 : vector<8xf32> to vector<8x1xf32>
    %cst_46 = arith.constant 3.200000e+01 : f32
    %133 = vector.broadcast %cst_46 : f32 to vector<8x1xf32>
    %134 = arith.divf %132, %133 : vector<8x1xf32>
    %135 = vector.broadcast %127 : vector<8x1xf32> to vector<8x32xf32>
    %136 = arith.subf %121, %135 : vector<8x32xf32>
    %cst_47 = arith.constant 9.99999974E-6 : f32
    %137 = vector.broadcast %cst_47 : f32 to vector<8x1xf32>
    %138 = arith.addf %134, %137 : vector<8x1xf32>
    %139 = math.rsqrt %138 : vector<8x1xf32>
    %140 = vector.broadcast %139 : vector<8x1xf32> to vector<8x32xf32>
    %141 = arith.mulf %136, %140 : vector<8x32xf32>
    %142 = vector.broadcast %122 : vector<1x32xf32> to vector<8x32xf32>
    %143 = arith.mulf %141, %142 : vector<8x32xf32>
    %144 = vector.broadcast %123 : vector<1x32xf32> to vector<8x32xf32>
    %145 = arith.addf %143, %144 : vector<8x32xf32>
    %146 = vector.shape_cast %145 : vector<8x32xf32> to vector<1x8x32xf32>
    %c0_48 = arith.constant 0 : index
    %c0_49 = arith.constant 0 : index
    %c0_50 = arith.constant 0 : index
    %147 = vector.load %arg15[%c0_48, %c0_49, %c0_50] : memref<1x8x32xf32, #tpu.memory_space<vmem>>, vector<1x8x32xf32>
    tpu.vector_store %arg15[%c0_48, %c0_49, %c0_50], %146 {strides = array<i32>} : memref<1x8x32xf32, #tpu.memory_space<vmem>>, vector<1x8x32xf32>,
    return
  }
  func.func @transform_0(%arg0: i32) -> (i32, i32, i32) {
    %c0_i32 = arith.constant 0 : i32
    %c0_i32_0 = arith.constant 0 : i32
    %c0_i32_1 = arith.constant 0 : i32
    return %arg0, %c0_i32, %c0_i32_0 : i32, i32, i32
  }
  func.func @transform_1(%arg0: i32) -> (i32, i32, i32) {
    %c0_i32 = arith.constant 0 : i32
    %c0_i32_0 = arith.constant 0 : i32
    %c0_i32_1 = arith.constant 0 : i32
    return %arg0, %c0_i32, %c0_i32_0 : i32, i32, i32
  }
  func.func @transform_2(%arg0: i32) -> (i32, i32) {
    %c0_i32 = arith.constant 0 : i32
    %c0_i32_0 = arith.constant 0 : i32
    %c0_i32_1 = arith.constant 0 : i32
    return %c0_i32, %c0_i32_0 : i32, i32
  }
  func.func @transform_3(%arg0: i32) -> (i32, i32) {
    %c0_i32 = arith.constant 0 : i32
    %c0_i32_0 = arith.constant 0 : i32
    %c0_i32_1 = arith.constant 0 : i32
    return %c0_i32, %c0_i32_0 : i32, i32
  }
  func.func @transform_4(%arg0: i32) -> (i32, i32) {
    %c0_i32 = arith.constant 0 : i32
    %c0_i32_0 = arith.constant 0 : i32
    %c0_i32_1 = arith.constant 0 : i32
    return %c0_i32, %c0_i32_0 : i32, i32
  }
  func.func @transform_5(%arg0: i32) -> (i32, i32) {
    %c0_i32 = arith.constant 0 : i32
    %c0_i32_0 = arith.constant 0 : i32
    %c0_i32_1 = arith.constant 0 : i32
    return %c0_i32, %c0_i32_0 : i32, i32
  }
  func.func @transform_6(%arg0: i32) -> (i32, i32) {
    %c0_i32 = arith.constant 0 : i32
    %c0_i32_0 = arith.constant 0 : i32
    %c0_i32_1 = arith.constant 0 : i32
    return %c0_i32, %c0_i32_0 : i32, i32
  }
  func.func @transform_7(%arg0: i32) -> (i32, i32) {
    %c0_i32 = arith.constant 0 : i32
    %c0_i32_0 = arith.constant 0 : i32
    %c0_i32_1 = arith.constant 0 : i32
    return %c0_i32, %c0_i32_0 : i32, i32
  }
  func.func @transform_8(%arg0: i32) -> (i32, i32) {
    %c0_i32 = arith.constant 0 : i32
    %c0_i32_0 = arith.constant 0 : i32
    %c0_i32_1 = arith.constant 0 : i32
    return %c0_i32, %c0_i32_0 : i32, i32
  }
  func.func @transform_9(%arg0: i32) -> (i32, i32) {
    %c0_i32 = arith.constant 0 : i32
    %c0_i32_0 = arith.constant 0 : i32
    %c0_i32_1 = arith.constant 0 : i32
    return %c0_i32, %c0_i32_0 : i32, i32
  }
  func.func @transform_10(%arg0: i32) -> (i32, i32) {
    %c0_i32 = arith.constant 0 : i32
    %c0_i32_0 = arith.constant 0 : i32
    %c0_i32_1 = arith.constant 0 : i32
    return %c0_i32, %c0_i32_0 : i32, i32
  }
  func.func @transform_11(%arg0: i32) -> (i32, i32) {
    %c0_i32 = arith.constant 0 : i32
    %c0_i32_0 = arith.constant 0 : i32
    %c0_i32_1 = arith.constant 0 : i32
    return %c0_i32, %c0_i32_0 : i32, i32
  }
  func.func @transform_12(%arg0: i32) -> (i32, i32) {
    %c0_i32 = arith.constant 0 : i32
    %c0_i32_0 = arith.constant 0 : i32
    %c0_i32_1 = arith.constant 0 : i32
    return %c0_i32, %c0_i32_0 : i32, i32
  }
  func.func @transform_13(%arg0: i32) -> (i32, i32) {
    %c0_i32 = arith.constant 0 : i32
    %c0_i32_0 = arith.constant 0 : i32
    %c0_i32_1 = arith.constant 0 : i32
    return %c0_i32, %c0_i32_0 : i32, i32
  }
  func.func @transform_14(%arg0: i32) -> (i32, i32, i32) {
    %c0_i32 = arith.constant 0 : i32
    %c0_i32_0 = arith.constant 0 : i32
    %c0_i32_1 = arith.constant 0 : i32
    return %arg0, %c0_i32, %c0_i32_0 : i32, i32, i32
  }
}

</mosaic_0001>

<llo_original>
// kernel: tpu_custom_call.1
$region0: #{tpu_custom_call.1}
  #allocation0 [shape = 'u32[]', space=smem, size = 0x4, offset = 0x4, fixed_abs, tag = 'smem constant byte address 0x4 - core index']
  #allocation1 [shape = 'u32[72,128]{1,0:T(1,128)}', space=vmem, size = 0x9000, scoped, tag = 'internal scratch']
  %s0 = inlined_call_operand.vmem [shape: f32[2,8,32], index: 0, kind: input, shape index: {}]
  %s1 = inlined_call_operand.vmem [shape: f32[2,8,32], index: 1, kind: input, shape index: {}]
  %s2 = inlined_call_operand.vmem [shape: bf16[32,96], index: 2, kind: input, shape index: {}]
  %s3 = inlined_call_operand.vmem [shape: f32[1,96], index: 3, kind: input, shape index: {}]
  %s4 = inlined_call_operand.hbm [shape: bf16[32,32], index: 4, kind: input, shape index: {}]
  %s5 = inlined_call_operand.vmem [shape: f32[1,32], index: 5, kind: input, shape index: {}]
  %s6 = inlined_call_operand.hbm [shape: bf16[32,64], index: 6, kind: input, shape index: {}]
  %s7 = inlined_call_operand.vmem [shape: f32[1,64], index: 7, kind: input, shape index: {}]
  %s8 = inlined_call_operand.vmem [shape: bf16[64,32], index: 8, kind: input, shape index: {}]
  %s9 = inlined_call_operand.vmem [shape: f32[1,32], index: 9, kind: input, shape index: {}]
  %s10 = inlined_call_operand.vmem [shape: f32[1,32], index: 10, kind: input, shape index: {}]
  %s11 = inlined_call_operand.vmem [shape: f32[1,32], index: 11, kind: input, shape index: {}]
  %s12 = inlined_call_operand.vmem [shape: f32[1,32], index: 12, kind: input, shape index: {}]
  %s13 = inlined_call_operand.vmem [shape: f32[1,32], index: 13, kind: input, shape index: {}]
  %s14 = inlined_call_operand.hbm [shape: f32[2,8,32], index: 14, kind: output, shape index: {}]
  %s15 = sld [smem:[#allocation0]]
  $region97: #{tpu_custom_call.1} parent=0
    _
  %s17 = ssub.s32 1, %s15
  %s18 = scalar_select 0, %s17, %s15
  $region1: #{tpu_custom_call.1} parent=0
    #allocation2 [shape = 'u8[8192]{0}', space=vmem, size = 0x2000, scoped, tag = 'input window, operand 4, single buffered']
    #allocation3 [shape = 's32[2]{0}', space=sflag, size = 0x8, scoped, tag = 'scoped memory for tpu_custom_call.1']
    #allocation4 [shape = 's32[2]{0}', space=sflag, size = 0x8, scoped, tag = 'scoped memory for tpu_custom_call.1']
    #allocation5 [shape = 'u8[8192]{0}', space=vmem, size = 0x2000, scoped, tag = 'input window, operand 6, single buffered']
    #allocation6 [shape = 's32[1]{0}', space=sflag, size = 0x4, scoped, tag = 'scoped memory for tpu_custom_call.1']
    #allocation7 [shape = 'u8[8192]{0}', space=vmem, size = 0x2000, scoped, tag = 'output window, operand 0']
    %19 = vsyncpa [#allocation3], 0
    %20 = vsyncpa [#allocation6], 0
    %21 = vsyncpa [#allocation4], 0
    %s22 = scalar_lea.sflag [#allocation4], 1
    %23 = vsyncpa %s22, 0
    loop: start=0, step=1, limit=4
    $region2: #{tpu_custom_call.1} parent=1 // loop_pre_header
      _
    $region3: #{tpu_custom_call.1} parent=1 // loop_header
      %s25 = sphi 0, %s29
      %p26 = scmp.ge.s32.totalorder %s25, 4
      %s35 = sphi 0, %s37
      %s38 = sphi 0, %s35
      %s39 = sphi 0, %s38
      %s55 = sphi 0, %s39
      %s61 = sphi 0, %s63
      %s64 = sphi 0, %s61
      %s65 = sphi 0, %s64
      %s81 = sphi 0, %s65
      %s85 = sphi 0, %s85
      %s87 = sphi 0, %s85
      %s88 = sphi 0, %s87
      %s102 = sphi 0, %s88
      %s106 = sphi 0, %s106
      %s108 = sphi 0, %s106
      %s109 = sphi 0, %s108
      %s123 = sphi 0, %s109
      %s127 = sphi 0, %s127
      %s129 = sphi 0, %s127
      %s130 = sphi 0, %s129
      %s144 = sphi 0, %s130
      %s148 = sphi 0, %s148
      %s150 = sphi 0, %s148
      %s151 = sphi 0, %s150
      %s165 = sphi 0, %s151
      %s169 = sphi 0, %s169
      %s171 = sphi 0, %s169
      %s172 = sphi 0, %s171
      %s186 = sphi 0, %s172
      %s190 = sphi 0, %s190
      %s192 = sphi 0, %s190
      %s193 = sphi 0, %s192
      %s207 = sphi 0, %s193
      %s211 = sphi 0, %s211
      %s213 = sphi 0, %s211
      %s214 = sphi 0, %s213
      %s228 = sphi 0, %s214
      %s232 = sphi 0, %s232
      %s234 = sphi 0, %s232
      %s235 = sphi 0, %s234
      %s249 = sphi 0, %s235
      %s253 = sphi 0, %s253
      %s255 = sphi 0, %s253
      %s256 = sphi 0, %s255
      %s270 = sphi 0, %s256
      %s274 = sphi 0, %s274
      %s276 = sphi 0, %s274
      %s277 = sphi 0, %s276
      %s291 = sphi 0, %s277
      %s295 = sphi 0, %s295
      %s297 = sphi 0, %s295
      %s298 = sphi 0, %s297
      %s312 = sphi 0, %s298
      %s316 = sphi 0, %s316
      %s318 = sphi 0, %s316
      %s319 = sphi 0, %s318
      %s333 = sphi 0, %s319
      %s339 = sphi 0, %s341
      %s342 = sphi 0, %s339
      %s343 = sphi 0, %s342
      %s359 = sphi 0, %s343
    $region4: #{tpu_custom_call.1} parent=1 // loop_header_branch
      %28 = sbr.rel (%p26) target = $region8
    $region5: #{tpu_custom_call.1} parent=1 // loop_body
      %s30 = ssub.s32 %s25, 1
      %s31 = ssub.s32 %s25, 2
      %s32 = sadd.s32 %s25, 1
      %s33 = ssub.s32 %s25, %s32
      %p34 = scmp.eq.s32.totalorder %s33, 0
      %s36 = sadd.s32 %s35, 1
      %s37 = scalar_select %p34, %s35, %s36
      %p40 = pneg %p34
      %p41 = scmp.eq.s32.totalorder %s25, 1
      %p42 = por %p40, %p41
      %p43 = scmp.ne.s32.totalorder %s35, %s38
      %p44 = scmp.eq.s32.totalorder %s25, 0
      %p45 = por %p43, %p44
      %p46 = scmp.ne.s32.totalorder %s35, %s38
      %p47 = scmp.eq.s32.totalorder %s30, 1
      %p48 = por %p46, %p47
      %p49 = scmp.ne.s32.totalorder %s38, %s39
      %p50 = scmp.eq.s32.totalorder %s30, 0
      %p51 = por %p49, %p50
      %p52 = scmp.ne.s32.totalorder %s38, %s39
      %p53 = scmp.eq.s32.totalorder %s31, 1
      %p54 = por %p52, %p53
      %p56 = scmp.ne.s32.totalorder %s39, %s55
      %p57 = scmp.eq.s32.totalorder %s31, 0
      %p58 = por %p56, %p57
      %s59 = ssub.s32 %s25, %s32
      %p60 = scmp.eq.s32.totalorder %s59, 0
      %s62 = sadd.s32 %s61, 1
      %s63 = scalar_select %p60, %s61, %s62
      %p66 = pneg %p60
      %p67 = scmp.eq.s32.totalorder %s25, 1
      %p68 = por %p66, %p67
      %p69 = scmp.ne.s32.totalorder %s61, %s64
      %p70 = scmp.eq.s32.totalorder %s25, 0
      %p71 = por %p69, %p70
      %p72 = scmp.ne.s32.totalorder %s61, %s64
      %p73 = scmp.eq.s32.totalorder %s30, 1
      %p74 = por %p72, %p73
      %p75 = scmp.ne.s32.totalorder %s64, %s65
      %p76 = scmp.eq.s32.totalorder %s30, 0
      %p77 = por %p75, %p76
      %p78 = scmp.ne.s32.totalorder %s64, %s65
      %p79 = scmp.eq.s32.totalorder %s31, 1
      %p80 = por %p78, %p79
      %p82 = scmp.ne.s32.totalorder %s65, %s81
      %p83 = scmp.eq.s32.totalorder %s31, 0
      %p84 = por %p82, %p83
      %s86 = sadd.s32 %s85, 1
      %p89 = scmp.eq.s32.totalorder %s25, 1
      %p90 = scmp.ne.s32.totalorder %s85, %s87
      %p91 = scmp.eq.s32.totalorder %s25, 0
      %p92 = por %p90, %p91
      %p93 = scmp.ne.s32.totalorder %s85, %s87
      %p94 = scmp.eq.s32.totalorder %s30, 1
      %p95 = por %p93, %p94
      %p96 = scmp.ne.s32.totalorder %s87, %s88
      %p97 = scmp.eq.s32.totalorder %s30, 0
      %p98 = por %p96, %p97
      %p99 = scmp.ne.s32.totalorder %s87, %s88
      %p100 = scmp.eq.s32.totalorder %s31, 1
      %p101 = por %p99, %p100
      %p103 = scmp.ne.s32.totalorder %s88, %s102
      %p104 = scmp.eq.s32.totalorder %s31, 0
      %p105 = por %p103, %p104
      %s107 = sadd.s32 %s106, 1
      %p110 = scmp.eq.s32.totalorder %s25, 1
      %p111 = scmp.ne.s32.totalorder %s106, %s108
      %p112 = scmp.eq.s32.totalorder %s25, 0
      %p113 = por %p111, %p112
      %p114 = scmp.ne.s32.totalorder %s106, %s108
      %p115 = scmp.eq.s32.totalorder %s30, 1
      %p116 = por %p114, %p115
      %p117 = scmp.ne.s32.totalorder %s108, %s109
      %p118 = scmp.eq.s32.totalorder %s30, 0
      %p119 = por %p117, %p118
      %p120 = scmp.ne.s32.totalorder %s108, %s109
      %p121 = scmp.eq.s32.totalorder %s31, 1
      %p122 = por %p120, %p121
      %p124 = scmp.ne.s32.totalorder %s109, %s123
      %p125 = scmp.eq.s32.totalorder %s31, 0
      %p126 = por %p124, %p125
      %s128 = sadd.s32 %s127, 1
      %p131 = scmp.eq.s32.totalorder %s25, 1
      %p132 = scmp.ne.s32.totalorder %s127, %s129
      %p133 = scmp.eq.s32.totalorder %s25, 0
      %p134 = por %p132, %p133
      %p135 = scmp.ne.s32.totalorder %s127, %s129
      %p136 = scmp.eq.s32.totalorder %s30, 1
      %p137 = por %p135, %p136
      %p138 = scmp.ne.s32.totalorder %s129, %s130
      %p139 = scmp.eq.s32.totalorder %s30, 0
      %p140 = por %p138, %p139
      %p141 = scmp.ne.s32.totalorder %s129, %s130
      %p142 = scmp.eq.s32.totalorder %s31, 1
      %p143 = por %p141, %p142
      %p145 = scmp.ne.s32.totalorder %s130, %s144
      %p146 = scmp.eq.s32.totalorder %s31, 0
      %p147 = por %p145, %p146
      %s149 = sadd.s32 %s148, 1
      %p152 = scmp.eq.s32.totalorder %s25, 1
      %p153 = scmp.ne.s32.totalorder %s148, %s150
      %p154 = scmp.eq.s32.totalorder %s25, 0
      %p155 = por %p153, %p154
      %p156 = scmp.ne.s32.totalorder %s148, %s150
      %p157 = scmp.eq.s32.totalorder %s30, 1
      %p158 = por %p156, %p157
      %p159 = scmp.ne.s32.totalorder %s150, %s151
      %p160 = scmp.eq.s32.totalorder %s30, 0
      %p161 = por %p159, %p160
      %p162 = scmp.ne.s32.totalorder %s150, %s151
      %p163 = scmp.eq.s32.totalorder %s31, 1
      %p164 = por %p162, %p163
      %p166 = scmp.ne.s32.totalorder %s151, %s165
      %p167 = scmp.eq.s32.totalorder %s31, 0
      %p168 = por %p166, %p167
      %s170 = sadd.s32 %s169, 1
      %p173 = scmp.eq.s32.totalorder %s25, 1
      %p174 = scmp.ne.s32.totalorder %s169, %s171
      %p175 = scmp.eq.s32.totalorder %s25, 0
      %p176 = por %p174, %p175
      %p177 = scmp.ne.s32.totalorder %s169, %s171
      %p178 = scmp.eq.s32.totalorder %s30, 1
      %p179 = por %p177, %p178
      %p180 = scmp.ne.s32.totalorder %s171, %s172
      %p181 = scmp.eq.s32.totalorder %s30, 0
      %p182 = por %p180, %p181
      %p183 = scmp.ne.s32.totalorder %s171, %s172
      %p184 = scmp.eq.s32.totalorder %s31, 1
      %p185 = por %p183, %p184
      %p187 = scmp.ne.s32.totalorder %s172, %s186
      %p188 = scmp.eq.s32.totalorder %s31, 0
      %p189 = por %p187, %p188
      %s191 = sadd.s32 %s190, 1
      %p194 = scmp.eq.s32.totalorder %s25, 1
      %p195 = scmp.ne.s32.totalorder %s190, %s192
      %p196 = scmp.eq.s32.totalorder %s25, 0
      %p197 = por %p195, %p196
      %p198 = scmp.ne.s32.totalorder %s190, %s192
      %p199 = scmp.eq.s32.totalorder %s30, 1
      %p200 = por %p198, %p199
      %p201 = scmp.ne.s32.totalorder %s192, %s193
      %p202 = scmp.eq.s32.totalorder %s30, 0
      %p203 = por %p201, %p202
      %p204 = scmp.ne.s32.totalorder %s192, %s193
      %p205 = scmp.eq.s32.totalorder %s31, 1
      %p206 = por %p204, %p205
      %p208 = scmp.ne.s32.totalorder %s193, %s207
      %p209 = scmp.eq.s32.totalorder %s31, 0
      %p210 = por %p208, %p209
      %s212 = sadd.s32 %s211, 1
      %p215 = scmp.eq.s32.totalorder %s25, 1
      %p216 = scmp.ne.s32.totalorder %s211, %s213
      %p217 = scmp.eq.s32.totalorder %s25, 0
      %p218 = por %p216, %p217
      %p219 = scmp.ne.s32.totalorder %s211, %s213
      %p220 = scmp.eq.s32.totalorder %s30, 1
      %p221 = por %p219, %p220
      %p222 = scmp.ne.s32.totalorder %s213, %s214
      %p223 = scmp.eq.s32.totalorder %s30, 0
      %p224 = por %p222, %p223
      %p225 = scmp.ne.s32.totalorder %s213, %s214
      %p226 = scmp.eq.s32.totalorder %s31, 1
      %p227 = por %p225, %p226
      %p229 = scmp.ne.s32.totalorder %s214, %s228
      %p230 = scmp.eq.s32.totalorder %s31, 0
      %p231 = por %p229, %p230
      %s233 = sadd.s32 %s232, 1
      %p236 = scmp.eq.s32.totalorder %s25, 1
      %p237 = scmp.ne.s32.totalorder %s232, %s234
      %p238 = scmp.eq.s32.totalorder %s25, 0
      %p239 = por %p237, %p238
      %p240 = scmp.ne.s32.totalorder %s232, %s234
      %p241 = scmp.eq.s32.totalorder %s30, 1
      %p242 = por %p240, %p241
      %p243 = scmp.ne.s32.totalorder %s234, %s235
      %p244 = scmp.eq.s32.totalorder %s30, 0
      %p245 = por %p243, %p244
      %p246 = scmp.ne.s32.totalorder %s234, %s235
      %p247 = scmp.eq.s32.totalorder %s31, 1
      %p248 = por %p246, %p247
      %p250 = scmp.ne.s32.totalorder %s235, %s249
      %p251 = scmp.eq.s32.totalorder %s31, 0
      %p252 = por %p250, %p251
      %s254 = sadd.s32 %s253, 1
      %p257 = scmp.eq.s32.totalorder %s25, 1
      %p258 = scmp.ne.s32.totalorder %s253, %s255
      %p259 = scmp.eq.s32.totalorder %s25, 0
      %p260 = por %p258, %p259
      %p261 = scmp.ne.s32.totalorder %s253, %s255
      %p262 = scmp.eq.s32.totalorder %s30, 1
      %p263 = por %p261, %p262
      %p264 = scmp.ne.s32.totalorder %s255, %s256
      %p265 = scmp.eq.s32.totalorder %s30, 0
      %p266 = por %p264, %p265
      %p267 = scmp.ne.s32.totalorder %s255, %s256
      %p268 = scmp.eq.s32.totalorder %s31, 1
      %p269 = por %p267, %p268
      %p271 = scmp.ne.s32.totalorder %s256, %s270
      %p272 = scmp.eq.s32.totalorder %s31, 0
      %p273 = por %p271, %p272
      %s275 = sadd.s32 %s274, 1
      %p278 = scmp.eq.s32.totalorder %s25, 1
      %p279 = scmp.ne.s32.totalorder %s274, %s276
      %p280 = scmp.eq.s32.totalorder %s25, 0
      %p281 = por %p279, %p280
      %p282 = scmp.ne.s32.totalorder %s274, %s276
      %p283 = scmp.eq.s32.totalorder %s30, 1
      %p284 = por %p282, %p283
      %p285 = scmp.ne.s32.totalorder %s276, %s277
      %p286 = scmp.eq.s32.totalorder %s30, 0
      %p287 = por %p285, %p286
      %p288 = scmp.ne.s32.totalorder %s276, %s277
      %p289 = scmp.eq.s32.totalorder %s31, 1
      %p290 = por %p288, %p289
      %p292 = scmp.ne.s32.totalorder %s277, %s291
      %p293 = scmp.eq.s32.totalorder %s31, 0
      %p294 = por %p292, %p293
      %s296 = sadd.s32 %s295, 1
      %p299 = scmp.eq.s32.totalorder %s25, 1
      %p300 = scmp.ne.s32.totalorder %s295, %s297
      %p301 = scmp.eq.s32.totalorder %s25, 0
      %p302 = por %p300, %p301
      %p303 = scmp.ne.s32.totalorder %s295, %s297
      %p304 = scmp.eq.s32.totalorder %s30, 1
      %p305 = por %p303, %p304
      %p306 = scmp.ne.s32.totalorder %s297, %s298
      %p307 = scmp.eq.s32.totalorder %s30, 0
      %p308 = por %p306, %p307
      %p309 = scmp.ne.s32.totalorder %s297, %s298
      %p310 = scmp.eq.s32.totalorder %s31, 1
      %p311 = por %p309, %p310
      %p313 = scmp.ne.s32.totalorder %s298, %s312
      %p314 = scmp.eq.s32.totalorder %s31, 0
      %p315 = por %p313, %p314
      %s317 = sadd.s32 %s316, 1
      %p320 = scmp.eq.s32.totalorder %s25, 1
      %p321 = scmp.ne.s32.totalorder %s316, %s318
      %p322 = scmp.eq.s32.totalorder %s25, 0
      %p323 = por %p321, %p322
      %p324 = scmp.ne.s32.totalorder %s316, %s318
      %p325 = scmp.eq.s32.totalorder %s30, 1
      %p326 = por %p324, %p325
      %p327 = scmp.ne.s32.totalorder %s318, %s319
      %p328 = scmp.eq.s32.totalorder %s30, 0
      %p329 = por %p327, %p328
      %p330 = scmp.ne.s32.totalorder %s318, %s319
      %p331 = scmp.eq.s32.totalorder %s31, 1
      %p332 = por %p330, %p331
      %p334 = scmp.ne.s32.totalorder %s319, %s333
      %p335 = scmp.eq.s32.totalorder %s31, 0
      %p336 = por %p334, %p335
      %s337 = ssub.s32 %s25, %s32
      %p338 = scmp.eq.s32.totalorder %s337, 0
      %s340 = sadd.s32 %s339, 1
      %s341 = scalar_select %p338, %s339, %s340
      %p344 = pneg %p338
      %p345 = scmp.eq.s32.totalorder %s25, 1
      %p346 = por %p344, %p345
      %p347 = scmp.ne.s32.totalorder %s339, %s342
      %p348 = scmp.eq.s32.totalorder %s25, 0
      %p349 = por %p347, %p348
      %p350 = scmp.ne.s32.totalorder %s339, %s342
      %p351 = scmp.eq.s32.totalorder %s30, 1
      %p352 = por %p350, %p351
      %p353 = scmp.ne.s32.totalorder %s342, %s343
      %p354 = scmp.eq.s32.totalorder %s30, 0
      %p355 = por %p353, %p354
      %p356 = scmp.ne.s32.totalorder %s342, %s343
      %p357 = scmp.eq.s32.totalorder %s31, 1
      %p358 = por %p356, %p357
      %p360 = scmp.ne.s32.totalorder %s343, %s359
      %p361 = scmp.eq.s32.totalorder %s31, 0
      %p362 = por %p360, %p361
      %p363 = scmp.le.s32.totalorder 1, %s25
      %p364 = scmp.lt.s32.totalorder %s25, 3
      %p365 = pnand %p363, %p364
      %p366 = pneg %p365
      // Predicated region
      $region9: #{tpu_custom_call.1} parent=5 // pred_check
        _
      $region10: #{tpu_custom_call.1} parent=5 // pred_check_branch
        %368 = sbr.rel (%p365) target = $region12
      $region11: #{tpu_custom_call.1} parent=5 // pred_region
        %s369 = ssub.s32 %s25, 1
        // Predicated region
        $region13: #{tpu_custom_call.1} parent=11 // pred_check
          %p370 = pneg %p98
        $region14: #{tpu_custom_call.1} parent=11 // pred_check_branch
          %372 = sbr.rel (%p370) target = $region16
        $region15: #{tpu_custom_call.1} parent=11 // pred_region
          _
        $region16: #{tpu_custom_call.1} parent=11 // pred_fallthru
          _
        // Predicated region
        $region17: #{tpu_custom_call.1} parent=11 // pred_check
          %p373 = pneg %p119
        $region18: #{tpu_custom_call.1} parent=11 // pred_check_branch
          %375 = sbr.rel (%p373) target = $region20
        $region19: #{tpu_custom_call.1} parent=11 // pred_region
          _
        $region20: #{tpu_custom_call.1} parent=11 // pred_fallthru
          _
        // Predicated region
        $region21: #{tpu_custom_call.1} parent=11 // pred_check
          %p376 = pneg %p140
        $region22: #{tpu_custom_call.1} parent=11 // pred_check_branch
          %378 = sbr.rel (%p376) target = $region24
        $region23: #{tpu_custom_call.1} parent=11 // pred_region
          %380 = vsyncadd [#allocation3], 0
          %s381 = sshll.u32 %s4, 4
          %s382 = int_to_ptr.hbm [resolvable:$true] %s381
          %s383 = sshll.u32 [#allocation2], 4
          %s384 = int_to_ptr.vmem [resolvable:$true] %s383
          %389 = dma.hbm_to_vmem [thread:$0]  %s382, 256, %s384, [#allocation3], 64, 64, 4
        $region24: #{tpu_custom_call.1} parent=11 // pred_fallthru
          _
        // Predicated region
        $region25: #{tpu_custom_call.1} parent=11 // pred_check
          %p390 = pneg %p161
        $region26: #{tpu_custom_call.1} parent=11 // pred_check_branch
          %392 = sbr.rel (%p390) target = $region28
        $region27: #{tpu_custom_call.1} parent=11 // pred_region
          _
        $region28: #{tpu_custom_call.1} parent=11 // pred_fallthru
          _
        // Predicated region
        $region29: #{tpu_custom_call.1} parent=11 // pred_check
          %p393 = pneg %p182
        $region30: #{tpu_custom_call.1} parent=11 // pred_check_branch
          %395 = sbr.rel (%p393) target = $region32
        $region31: #{tpu_custom_call.1} parent=11 // pred_region
          %397 = vsyncadd [#allocation6], 0
          %s398 = sshll.u32 %s6, 4
          %s399 = int_to_ptr.hbm [resolvable:$true] %s398
          %s400 = sshll.u32 [#allocation5], 4
          %s401 = int_to_ptr.vmem [resolvable:$true] %s400
          %406 = dma.hbm_to_vmem [thread:$0]  %s399, 256, %s401, [#allocation6], 64, 64, 4
        $region32: #{tpu_custom_call.1} parent=11 // pred_fallthru
          _
        // Predicated region
        $region33: #{tpu_custom_call.1} parent=11 // pred_check
          %p407 = pneg %p203
        $region34: #{tpu_custom_call.1} parent=11 // pred_check_branch
          %409 = sbr.rel (%p407) target = $region36
        $region35: #{tpu_custom_call.1} parent=11 // pred_region
          _
        $region36: #{tpu_custom_call.1} parent=11 // pred_fallthru
          _
        // Predicated region
        $region37: #{tpu_custom_call.1} parent=11 // pred_check
          %p410 = pneg %p224
        $region38: #{tpu_custom_call.1} parent=11 // pred_check_branch
          %412 = sbr.rel (%p410) target = $region40
        $region39: #{tpu_custom_call.1} parent=11 // pred_region
          _
        $region40: #{tpu_custom_call.1} parent=11 // pred_fallthru
          _
        // Predicated region
        $region41: #{tpu_custom_call.1} parent=11 // pred_check
          %p413 = pneg %p245
        $region42: #{tpu_custom_call.1} parent=11 // pred_check_branch
          %415 = sbr.rel (%p413) target = $region44
        $region43: #{tpu_custom_call.1} parent=11 // pred_region
          _
        $region44: #{tpu_custom_call.1} parent=11 // pred_fallthru
          _
        // Predicated region
        $region45: #{tpu_custom_call.1} parent=11 // pred_check
          %p416 = pneg %p266
        $region46: #{tpu_custom_call.1} parent=11 // pred_check_branch
          %418 = sbr.rel (%p416) target = $region48
        $region47: #{tpu_custom_call.1} parent=11 // pred_region
          _
        $region48: #{tpu_custom_call.1} parent=11 // pred_fallthru
          _
        // Predicated region
        $region49: #{tpu_custom_call.1} parent=11 // pred_check
          %p419 = pneg %p287
        $region50: #{tpu_custom_call.1} parent=11 // pred_check_branch
          %421 = sbr.rel (%p419) target = $region52
        $region51: #{tpu_custom_call.1} parent=11 // pred_region
          _
        $region52: #{tpu_custom_call.1} parent=11 // pred_fallthru
          _
        // Predicated region
        $region53: #{tpu_custom_call.1} parent=11 // pred_check
          %p422 = pneg %p308
        $region54: #{tpu_custom_call.1} parent=11 // pred_check_branch
          %424 = sbr.rel (%p422) target = $region56
        $region55: #{tpu_custom_call.1} parent=11 // pred_region
          _
        $region56: #{tpu_custom_call.1} parent=11 // pred_fallthru
          _
        // Predicated region
        $region57: #{tpu_custom_call.1} parent=11 // pred_check
          %p425 = pneg %p329
        $region58: #{tpu_custom_call.1} parent=11 // pred_check_branch
          %427 = sbr.rel (%p425) target = $region60
        $region59: #{tpu_custom_call.1} parent=11 // pred_region
          _
        $region60: #{tpu_custom_call.1} parent=11 // pred_fallthru
          _
      $region12: #{tpu_custom_call.1} parent=5 // pred_fallthru
        _
      %p428 = scmp.lt.s32.totalorder %s25, 2
      // Predicated region
      $region61: #{tpu_custom_call.1} parent=5 // pred_check
        %p429 = pneg %p428
      $region62: #{tpu_custom_call.1} parent=5 // pred_check_branch
        %431 = sbr.rel (%p429) target = $region64
      $region63: #{tpu_custom_call.1} parent=5 // pred_region
        // Predicated region
        $region65: #{tpu_custom_call.1} parent=63 // pred_check
          %p432 = pneg %p45
        $region66: #{tpu_custom_call.1} parent=63 // pred_check_branch
          %434 = sbr.rel (%p432) target = $region68
        $region67: #{tpu_custom_call.1} parent=63 // pred_region
          %p435 = scmp.lt.s32.totalorder %s25, 1
          %s436 = scalar_select %p435, %s25, 1
          %s437 = smul.addr %s436, 8
          %s438 = scalar_lea.vmem %s0, %s437
        $region68: #{tpu_custom_call.1} parent=63 // pred_fallthru
          _
        // Predicated region
        $region69: #{tpu_custom_call.1} parent=63 // pred_check
          %p439 = pneg %p71
        $region70: #{tpu_custom_call.1} parent=63 // pred_check_branch
          %441 = sbr.rel (%p439) target = $region72
        $region71: #{tpu_custom_call.1} parent=63 // pred_region
          %p442 = scmp.lt.s32.totalorder %s25, 1
          %s443 = scalar_select %p442, %s25, 1
          %s444 = smul.addr %s443, 8
          %s445 = scalar_lea.vmem %s1, %s444
        $region72: #{tpu_custom_call.1} parent=63 // pred_fallthru
          _
      $region64: #{tpu_custom_call.1} parent=5 // pred_fallthru
        _
      %p446 = scmp.le.s32.totalorder 1, %s25
      %p447 = scmp.lt.s32.totalorder %s25, 3
      %p448 = pnand %p446, %p447
      %p449 = pneg %p448
      // Predicated region
      $region73: #{tpu_custom_call.1} parent=5 // pred_check
        _
      $region74: #{tpu_custom_call.1} parent=5 // pred_check_branch
        %451 = sbr.rel (%p448) target = $region76
      $region75: #{tpu_custom_call.1} parent=5 // pred_region
        %s452 = ssub.s32 %s25, 1
        // Predicated region
        $region77: #{tpu_custom_call.1} parent=75 // pred_check
          %p453 = pneg %p140
        $region78: #{tpu_custom_call.1} parent=75 // pred_check_branch
          %455 = sbr.rel (%p453) target = $region80
        $region79: #{tpu_custom_call.1} parent=75 // pred_region
          %457 = dma.done [#allocation3], 256
        $region80: #{tpu_custom_call.1} parent=75 // pred_fallthru
          _
        // Predicated region
        $region81: #{tpu_custom_call.1} parent=75 // pred_check
          %p458 = pneg %p182
        $region82: #{tpu_custom_call.1} parent=75 // pred_check_branch
          %460 = sbr.rel (%p458) target = $region84
        $region83: #{tpu_custom_call.1} parent=75 // pred_region
          %462 = dma.done [#allocation6], 256
        $region84: #{tpu_custom_call.1} parent=75 // pred_fallthru
          _
        %p463 = scmp.lt.s32.totalorder %s30, 1
        %s464 = scalar_select %p463, %s30, 1
        %s465 = smul.addr %s464, 8
        %s466 = scalar_lea.vmem %s0, %s465
        %p467 = pneg %p51
        %p468 = pneg %p48
        %p469 = scmp.lt.s32.totalorder %s30, 1
        %s470 = scalar_select %p469, %s30, 1
        %s471 = smul.addr %s470, 8
        %s472 = scalar_lea.vmem %s1, %s471
        %p473 = pneg %p77
        %p474 = pneg %p74
        %p475 = pneg %p98
        %p476 = pneg %p95
        %p477 = pneg %p119
        %p478 = pneg %p116
        %p479 = pneg %p140
        %p480 = pneg %p137
        %p481 = pneg %p161
        %p482 = pneg %p158
        %p483 = pneg %p182
        %p484 = pneg %p179
        %p485 = pneg %p203
        %p486 = pneg %p200
        %p487 = pneg %p224
        %p488 = pneg %p221
        %p489 = pneg %p245
        %p490 = pneg %p242
        %p491 = pneg %p266
        %p492 = pneg %p263
        %p493 = pneg %p287
        %p494 = pneg %p284
        %p495 = pneg %p308
        %p496 = pneg %p305
        %p497 = pneg %p329
        %p498 = pneg %p326
        %p499 = pneg %p355
        %p500 = pneg %p352
        %s501 = sand.u32 %s342, 1
        %s502 = scalar_lea.sflag [#allocation4], %s501
        %s503 = sand.u32 %s342, 1
        %s504 = smul.addr %s503, 8
        %s505 = scalar_lea.vmem [#allocation7], %s504
        %p506 = scmp.lt.s32.totalorder %s30, 1
        %s507 = scalar_select %p506, %s30, 1
        %s508 = smul.addr %s507, 8
        %s509 = scalar_lea.vmem %s0, %s508
        %p510 = scmp.lt.s32.totalorder %s30, 1
        %s511 = scalar_select %p510, %s30, 1
        %s512 = smul.addr %s511, 8
        %s513 = scalar_lea.vmem %s1, %s512
        %v515 = vld [vmem:[%s509] sm:$0xff]
        %v516 = vld [vmem:[%s513] sm:$0xff]
        %v517 = vadd.f32 %v515, %v516
        %v518 = vpack.c.bf16 %v517, %v517
        %v519 = vpack.c.bf16 %v515, %v515
        %v520 = vld [vmem:[%s2] sm:$0xf]
        %v521 = vld [vmem:[%s2 + $0x4] sm:$0xf]
        %v522 = vld [vmem:[%s2 + $0x8] sm:$0xf]
        %v523 = vld [vmem:[%s2 + $0xc] sm:$0xf]
        %v524 = vld [vmem:[%s3] sm:$0x1]
        %v529 = vunpack.c.l.b16 %v520
        %v530 = vunpack.c.l.b16 %v521
        %v531 = vunpack.c.l.b16 %v522
        %v532 = vunpack.c.l.b16 %v523
        %v533 = vpack.c.b16 %v530, %v529
        %v534 = vpack.c.b16 %v532, %v531
        %vm537 = vcmask 261120
        %v539 = vsel %vm537, %v518, 0
        %541 = vmatpush.bf16.msra.mxu0 0
        %542 = vmatpush.bf16.msra.mxu0 0
        %543 = vmatpush.bf16.msra.mxu0 0
        %544 = vmatpush.bf16.msra.mxu0 0
        %545 = vmatpush.bf16.msra.mxu0 0
        %546 = vmatpush.bf16.msra.mxu0 0
        %547 = vmatpush.bf16.msra.mxu0 %v534
        %548 = vmatpush.bf16.msra.mxu0 %v533
        %549 = vmatmul.bf16.gmra.mxu0 %v539
        %v550 = vpop.f32.mrf.mxu0
        %v551 = vadd.f32 0.0, %v550
        %v552 = vpop.f32.mrf.mxu0
        %553 = vdwg.mxu0
        %v555 = vperm.slane %v524, 0
        %v557 = vadd.f32 %v551, %v555
        %558 = vrot.lane.b32.xlu0 %v533, 64
        %v559 = vpop.permute.xlu0 %558
        %560 = vrot.lane.b32.xlu0 %v534, 64
        %v561 = vpop.permute.xlu0 %560
        %564 = vrot.lane.b32.xlu0 %v555, 64
        %v565 = vpop.permute.xlu0 %564
        %v568 = vsel %vm537, %v519, 0
        %570 = vmatpush.bf16.msra.mxu0 0
        %571 = vmatpush.bf16.msra.mxu0 0
        %572 = vmatpush.bf16.msra.mxu0 0
        %573 = vmatpush.bf16.msra.mxu0 0
        %574 = vmatpush.bf16.msra.mxu0 0
        %575 = vmatpush.bf16.msra.mxu0 0
        %576 = vmatpush.bf16.msra.mxu0 %v561
        %577 = vmatpush.bf16.msra.mxu0 %v559
        %578 = vmatmul.bf16.gmra.mxu0 %v568
        %v579 = vpop.f32.mrf.mxu0
        %v580 = vadd.f32 %v565, %v579
        %v581 = vpop.f32.mrf.mxu0
        %582 = vdwg.mxu0
        %584 = vrot.lane.b32.xlu0 %v557, 120
        %v585 = vpop.permute.xlu0 %584
        %587 = vrot.lane.b32.xlu0 %v557, 112
        %v588 = vpop.permute.xlu0 %587
        %590 = vrot.lane.b32.xlu0 %v557, 104
        %v591 = vpop.permute.xlu0 %590
        %v593 = vpack.c.bf16 %v557, %v557
        %v594 = vpack.c.bf16 %v585, %v585
        %v595 = vpack.c.bf16 %v588, %v588
        %v596 = vpack.c.bf16 %v591, %v591
        %598 = vrot.lane.b32.xlu0 %v580, 120
        %v599 = vpop.permute.xlu0 %598
        %601 = vrot.lane.b32.xlu0 %v580, 112
        %v602 = vpop.permute.xlu0 %601
        %604 = vrot.lane.b32.xlu0 %v580, 104
        %v605 = vpop.permute.xlu0 %604
        %v607 = vpack.c.bf16 %v580, %v580
        %v608 = vpack.c.bf16 %v599, %v599
        %v609 = vpack.c.bf16 %v602, %v602
        %v610 = vpack.c.bf16 %v605, %v605
        %v612 = vunpack.c.l.b16 %v593
        %v613 = vpack.c.b16 %v612, %v612
        %614 = vrot.lane.b32.xlu0 %v613, 96
        %v615 = vpop.permute.xlu0 %614
        %vm616 = vcmask 64512
        %v618 = vsel %vm616, %v593, 0
        %v621 = vsel %vm616, %v615, 0
        %623 = vmatpush.bf16.xpose.msra.mxu0 0
        %624 = vmatpush.bf16.xpose.msra.mxu0 0
        %625 = vmatpush.bf16.xpose.msra.mxu0 0
        %626 = vmatpush.bf16.xpose.msra.mxu0 0
        %627 = vmatpush.bf16.xpose.msra.mxu0 0
        %628 = vmatpush.bf16.xpose.msra.mxu0 0
        %629 = vmatpush.bf16.xpose.msra.mxu0 0
        %630 = vmatpush.bf16.xpose.msra.mxu0 %v621
        %631 = vmatmul.bf16.gmra.mxu0 %v618
        %v632 = vpop.f32.mrf.mxu0
        %v633 = vadd.f32 0.0, %v632
        %v634 = vpop.f32.mrf.mxu0
        %635 = vdwg.mxu0
        %v637 = vunpack.c.l.b16 %v594
        %v638 = vpack.c.b16 %v637, %v637
        %639 = vrot.lane.b32.xlu0 %v638, 96
        %v640 = vpop.permute.xlu0 %639
        %v642 = vsel %vm616, %v594, 0
        %v645 = vsel %vm616, %v640, 0
        %647 = vmatpush.bf16.xpose.msra.mxu0 0
        %648 = vmatpush.bf16.xpose.msra.mxu0 0
        %649 = vmatpush.bf16.xpose.msra.mxu0 0
        %650 = vmatpush.bf16.xpose.msra.mxu0 0
        %651 = vmatpush.bf16.xpose.msra.mxu0 0
        %652 = vmatpush.bf16.xpose.msra.mxu0 0
        %653 = vmatpush.bf16.xpose.msra.mxu0 0
        %654 = vmatpush.bf16.xpose.msra.mxu0 %v645
        %655 = vmatmul.bf16.gmra.mxu0 %v642
        %v656 = vpop.f32.mrf.mxu0
        %v657 = vadd.f32 0.0, %v656
        %v658 = vpop.f32.mrf.mxu0
        %659 = vdwg.mxu0
        %v661 = vunpack.c.l.b16 %v595
        %v662 = vpack.c.b16 %v661, %v661
        %663 = vrot.lane.b32.xlu0 %v662, 96
        %v664 = vpop.permute.xlu0 %663
        %v666 = vsel %vm616, %v595, 0
        %v669 = vsel %vm616, %v664, 0
        %671 = vmatpush.bf16.xpose.msra.mxu0 0
        %672 = vmatpush.bf16.xpose.msra.mxu0 0
        %673 = vmatpush.bf16.xpose.msra.mxu0 0
        %674 = vmatpush.bf16.xpose.msra.mxu0 0
        %675 = vmatpush.bf16.xpose.msra.mxu0 0
        %676 = vmatpush.bf16.xpose.msra.mxu0 0
        %677 = vmatpush.bf16.xpose.msra.mxu0 0
        %678 = vmatpush.bf16.xpose.msra.mxu0 %v669
        %679 = vmatmul.bf16.gmra.mxu0 %v666
        %v680 = vpop.f32.mrf.mxu0
        %v681 = vadd.f32 0.0, %v680
        %v682 = vpop.f32.mrf.mxu0
        %683 = vdwg.mxu0
        %v685 = vunpack.c.l.b16 %v596
        %v686 = vpack.c.b16 %v685, %v685
        %687 = vrot.lane.b32.xlu0 %v686, 96
        %v688 = vpop.permute.xlu0 %687
        %v690 = vsel %vm616, %v596, 0
        %v693 = vsel %vm616, %v688, 0
        %695 = vmatpush.bf16.xpose.msra.mxu0 0
        %696 = vmatpush.bf16.xpose.msra.mxu0 0
        %697 = vmatpush.bf16.xpose.msra.mxu0 0
        %698 = vmatpush.bf16.xpose.msra.mxu0 0
        %699 = vmatpush.bf16.xpose.msra.mxu0 0
        %700 = vmatpush.bf16.xpose.msra.mxu0 0
        %701 = vmatpush.bf16.xpose.msra.mxu0 0
        %702 = vmatpush.bf16.xpose.msra.mxu0 %v693
        %703 = vmatmul.bf16.gmra.mxu0 %v690
        %v704 = vpop.f32.mrf.mxu0
        %v705 = vadd.f32 0.0, %v704
        %v706 = vpop.f32.mrf.mxu0
        %707 = vdwg.mxu0
        %v708 = vsel %vm616, %v633, -inf
        %709 = vmax.xlane.f32.xlu0 %v708
        %v710 = vpop.xlane.xlu0 %709
        %v711 = vsel %vm616, %v657, -inf
        %712 = vmax.xlane.f32.xlu0 %v711
        %v713 = vpop.xlane.xlu0 %712
        %v714 = vsel %vm616, %v681, -inf
        %715 = vmax.xlane.f32.xlu0 %v714
        %v716 = vpop.xlane.xlu0 %715
        %v717 = vsel %vm616, %v705, -inf
        %718 = vmax.xlane.f32.xlu0 %v717
        %v719 = vpop.xlane.xlu0 %718
        %v720 = vsub.f32 %v633, %v710
        %v721 = vsub.f32 %v657, %v713
        %v722 = vsub.f32 %v681, %v716
        %v723 = vsub.f32 %v705, %v719
        %v724 = vmul.f32 %v720, 1.442695
        %v725 = vpow.pop %v724
        %v726 = vmul.f32 %v721, 1.442695
        %v727 = vpow.pop %v726
        %v728 = vmul.f32 %v722, 1.442695
        %v729 = vpow.pop %v728
        %v730 = vmul.f32 %v723, 1.442695
        %v731 = vpow.pop %v730
        %v732 = vsel %vm616, %v725, 0.0
        %733 = vadd.xlane.f32.xlu0 %v732
        %v734 = vpop.xlane.xlu0 %733
        %v735 = vsel %vm616, %v727, 0.0
        %736 = vadd.xlane.f32.xlu0 %v735
        %v737 = vpop.xlane.xlu0 %736
        %v738 = vsel %vm616, %v729, 0.0
        %739 = vadd.xlane.f32.xlu0 %v738
        %v740 = vpop.xlane.xlu0 %739
        %v741 = vsel %vm616, %v731, 0.0
        %742 = vadd.xlane.f32.xlu0 %v741
        %v743 = vpop.xlane.xlu0 %742
        %v744 = vrcp.pop %v734
        %v745 = vrcp.pop %v737
        %v746 = vrcp.pop %v740
        %v747 = vrcp.pop %v743
        %v748 = vmul.f32 %v725, %v744
        %v749 = vmul.f32 %v727, %v745
        %v750 = vmul.f32 %v729, %v746
        %v751 = vmul.f32 %v731, %v747
        %v752 = vpack.c.bf16 %v748, %v748
        %v753 = vpack.c.bf16 %v749, %v749
        %v754 = vpack.c.bf16 %v750, %v750
        %v755 = vpack.c.bf16 %v751, %v751
        %v757 = vsel %vm616, %v752, 0
        %vm759 = vcmask 1043456
        %v761 = vsel %vm759, %v607, 0
        %763 = vmatpush.bf16.msra.mxu0 0
        %764 = vmatpush.bf16.msra.mxu0 0
        %765 = vmatpush.bf16.msra.mxu0 0
        %766 = vmatpush.bf16.msra.mxu0 0
        %767 = vmatpush.bf16.msra.mxu0 0
        %768 = vmatpush.bf16.msra.mxu0 0
        %769 = vmatpush.bf16.msra.mxu0 0
        %770 = vmatpush.bf16.msra.mxu0 %v761
        %771 = vmatmul.bf16.gmra.mxu0 %v757
        %v772 = vpop.f32.mrf.mxu0
        %v773 = vadd.f32 0.0, %v772
        %v774 = vpop.f32.mrf.mxu0
        %775 = vdwg.mxu0
        %v777 = vsel %vm616, %v753, 0
        %v780 = vsel %vm759, %v608, 0
        %782 = vmatpush.bf16.msra.mxu0 0
        %783 = vmatpush.bf16.msra.mxu0 0
        %784 = vmatpush.bf16.msra.mxu0 0
        %785 = vmatpush.bf16.msra.mxu0 0
        %786 = vmatpush.bf16.msra.mxu0 0
        %787 = vmatpush.bf16.msra.mxu0 0
        %788 = vmatpush.bf16.msra.mxu0 0
        %789 = vmatpush.bf16.msra.mxu0 %v780
        %790 = vmatmul.bf16.gmra.mxu0 %v777
        %v791 = vpop.f32.mrf.mxu0
        %v792 = vadd.f32 0.0, %v791
        %v793 = vpop.f32.mrf.mxu0
        %794 = vdwg.mxu0
        %v796 = vsel %vm616, %v754, 0
        %v799 = vsel %vm759, %v609, 0
        %801 = vmatpush.bf16.msra.mxu0 0
        %802 = vmatpush.bf16.msra.mxu0 0
        %803 = vmatpush.bf16.msra.mxu0 0
        %804 = vmatpush.bf16.msra.mxu0 0
        %805 = vmatpush.bf16.msra.mxu0 0
        %806 = vmatpush.bf16.msra.mxu0 0
        %807 = vmatpush.bf16.msra.mxu0 0
        %808 = vmatpush.bf16.msra.mxu0 %v799
        %809 = vmatmul.bf16.gmra.mxu0 %v796
        %v810 = vpop.f32.mrf.mxu0
        %v811 = vadd.f32 0.0, %v810
        %v812 = vpop.f32.mrf.mxu0
        %813 = vdwg.mxu0
        %v815 = vsel %vm616, %v755, 0
        %v818 = vsel %vm759, %v610, 0
        %820 = vmatpush.bf16.msra.mxu0 0
        %821 = vmatpush.bf16.msra.mxu0 0
        %822 = vmatpush.bf16.msra.mxu0 0
        %823 = vmatpush.bf16.msra.mxu0 0
        %824 = vmatpush.bf16.msra.mxu0 0
        %825 = vmatpush.bf16.msra.mxu0 0
        %826 = vmatpush.bf16.msra.mxu0 0
        %827 = vmatpush.bf16.msra.mxu0 %v818
        %828 = vmatmul.bf16.gmra.mxu0 %v815
        %v829 = vpop.f32.mrf.mxu0
        %v830 = vadd.f32 0.0, %v829
        %v831 = vpop.f32.mrf.mxu0
        %832 = vdwg.mxu0
        %834 = vrot.lane.b32.xlu0 %v792, 8
        %v835 = vpop.permute.xlu0 %834
        %838 = vrot.lane.b32.xlu0 %v811, 16
        %v839 = vpop.permute.xlu0 %838
        %842 = vrot.lane.b32.xlu0 %v830, 24
        %v843 = vpop.permute.xlu0 %842
        %v845 = vsel %vm616, %v773, %v835
        %vm846 = vcmask 130048
        %v847 = vsel %vm846, %v845, %v839
        %vm848 = vcmask 195584
        %v849 = vsel %vm848, %v847, %v843
        %v850 = vpack.c.bf16 %v849, %v849
        %v851 = vld [vmem:[#allocation2] sm:$0xf]
        %v852 = vld [vmem:[#allocation2 + $0x4] sm:$0xf]
        %v853 = vld [vmem:[#allocation2 + $0x8] sm:$0xf]
        %v854 = vld [vmem:[#allocation2 + $0xc] sm:$0xf]
        %v855 = vld [vmem:[%s5] sm:$0x1]
        %v857 = vperm.slane %v855, 0
        %v863 = vunpack.c.l.b16 %v851
        %v864 = vunpack.c.l.b16 %v852
        %v865 = vunpack.c.l.b16 %v853
        %v866 = vunpack.c.l.b16 %v854
        %v867 = vpack.c.b16 %v864, %v863
        %v868 = vpack.c.b16 %v866, %v865
        %v872 = vsel %vm537, %v850, 0
        %874 = vmatpush.bf16.msra.mxu0 0
        %875 = vmatpush.bf16.msra.mxu0 0
        %876 = vmatpush.bf16.msra.mxu0 0
        %877 = vmatpush.bf16.msra.mxu0 0
        %878 = vmatpush.bf16.msra.mxu0 0
        %879 = vmatpush.bf16.msra.mxu0 0
        %880 = vmatpush.bf16.msra.mxu0 %v868
        %881 = vmatpush.bf16.msra.mxu0 %v867
        %882 = vmatmul.bf16.gmra.mxu0 %v872
        %v883 = vpop.f32.mrf.mxu0
        %v884 = vadd.f32 %v857, %v883
        %v885 = vpop.f32.mrf.mxu0
        %886 = vdwg.mxu0
        %v887 = vadd.f32 %v515, %v884
        %v888 = vld [vmem:[%s10] sm:$0x1]
        %v889 = vld [vmem:[%s11] sm:$0x1]
        %v890 = vsel %vm537, %v887, 0.0
        %891 = vadd.xlane.f32.xlu0 %v890
        %v892 = vpop.xlane.xlu0 %891
        %v893 = vrcp.pop 32.0
        %v894 = vmul.f32 32.0, %v893
        %v895 = vsub.f32 1.0, %v894
        %v896 = vmul.f32 %v893, %v895
        %v897 = vadd.f32 %v893, %v896
        %vm898 = vweird.f32 %v893
        %v899 = vsel %vm898, %v893, %v897
        %v900 = vmul.f32 %v892, %v899
        %v901 = vsub.f32 %v887, %v900
        %v902 = vmul.f32 %v901, %v901
        %v903 = vsel %vm537, %v902, 0.0
        %904 = vadd.xlane.f32.xlu0 %v903
        %v905 = vpop.xlane.xlu0 %904
        %v906 = vmul.f32 %v905, %v899
        %v907 = vadd.f32 %v906, 1e-05
        %v908 = vrsqrt.pop %v907
        %v909 = vmul.f32 %v908, %v907
        %v910 = vmul.f32 %v909, %v908
        %v911 = vmul.f32 0.5, %v910
        %v912 = vsub.f32 1.5, %v911
        %v913 = vmul.f32 %v908, %v912
        %vm914 = vweird.f32 %v907
        %vm915 = vweird.f32 %v908
        %vm916 = vmor %vm914, %vm915
        %v917 = vsel %vm916, %v908, %v913
        %v918 = vmul.f32 %v901, %v917
        %v920 = vperm.slane %v888, 0
        %v922 = vmul.f32 %v918, %v920
        %v924 = vperm.slane %v889, 0
        %v926 = vadd.f32 %v922, %v924
        %v927 = vpack.c.bf16 %v926, %v926
        %v928 = vld [vmem:[#allocation5] sm:$0xf]
        %v929 = vld [vmem:[#allocation5 + $0x4] sm:$0xf]
        %v930 = vld [vmem:[#allocation5 + $0x8] sm:$0xf]
        %v931 = vld [vmem:[#allocation5 + $0xc] sm:$0xf]
        %v932 = vld [vmem:[%s7] sm:$0x1]
        %v934 = vperm.slane %v932, 0
        %v940 = vunpack.c.l.b16 %v928
        %v941 = vunpack.c.l.b16 %v929
        %v942 = vunpack.c.l.b16 %v930
        %v943 = vunpack.c.l.b16 %v931
        %v944 = vpack.c.b16 %v941, %v940
        %v945 = vpack.c.b16 %v943, %v942
        %v949 = vsel %vm537, %v927, 0
        %951 = vmatpush.bf16.msra.mxu0 0
        %952 = vmatpush.bf16.msra.mxu0 0
        %953 = vmatpush.bf16.msra.mxu0 0
        %954 = vmatpush.bf16.msra.mxu0 0
        %955 = vmatpush.bf16.msra.mxu0 0
        %956 = vmatpush.bf16.msra.mxu0 0
        %957 = vmatpush.bf16.msra.mxu0 %v945
        %958 = vmatpush.bf16.msra.mxu0 %v944
        %959 = vmatmul.bf16.gmra.mxu0 %v949
        %v960 = vpop.f32.mrf.mxu0
        %v961 = vadd.f32 %v934, %v960
        %v962 = vpop.f32.mrf.mxu0
        %963 = vdwg.mxu0
        %v964 = vmax.f32 %v961, 0.0
        %v965 = vpack.c.bf16 %v964, %v964
        %v966 = vld [vmem:[%s8] sm:$0xf]
        %v967 = vld [vmem:[%s8 + $0x4] sm:$0xf]
        %v968 = vld [vmem:[%s8 + $0x8] sm:$0xf]
        %v969 = vld [vmem:[%s8 + $0xc] sm:$0xf]
        %v970 = vld [vmem:[%s8 + $0x10] sm:$0xf]
        %v971 = vld [vmem:[%s8 + $0x14] sm:$0xf]
        %v972 = vld [vmem:[%s8 + $0x18] sm:$0xf]
        %v973 = vld [vmem:[%s8 + $0x1c] sm:$0xf]
        %v974 = vld [vmem:[%s9] sm:$0x1]
        %v976 = vperm.slane %v974, 0
        %v986 = vunpack.c.l.b16 %v966
        %v987 = vunpack.c.l.b16 %v967
        %v988 = vunpack.c.l.b16 %v968
        %v989 = vunpack.c.l.b16 %v969
        %v990 = vunpack.c.l.b16 %v970
        %v991 = vunpack.c.l.b16 %v971
        %v992 = vunpack.c.l.b16 %v972
        %v993 = vunpack.c.l.b16 %v973
        %v994 = vpack.c.b16 %v987, %v986
        %v995 = vpack.c.b16 %v989, %v988
        %v996 = vpack.c.b16 %v991, %v990
        %v997 = vpack.c.b16 %v993, %v992
        %vm1002 = vcmask 523264
        %v1004 = vsel %vm1002, %v965, 0
        %1006 = vmatpush.bf16.msra.mxu0 0
        %1007 = vmatpush.bf16.msra.mxu0 0
        %1008 = vmatpush.bf16.msra.mxu0 0
        %1009 = vmatpush.bf16.msra.mxu0 0
        %1010 = vmatpush.bf16.msra.mxu0 %v997
        %1011 = vmatpush.bf16.msra.mxu0 %v996
        %1012 = vmatpush.bf16.msra.mxu0 %v995
        %1013 = vmatpush.bf16.msra.mxu0 %v994
        %1014 = vmatmul.bf16.gmra.mxu0 %v1004
        %v1015 = vpop.f32.mrf.mxu0
        %v1016 = vadd.f32 %v976, %v1015
        %v1017 = vpop.f32.mrf.mxu0
        %1018 = vdwg.mxu0
        %v1019 = vadd.f32 %v926, %v1016
        %v1020 = vld [vmem:[%s12] sm:$0x1]
        %v1021 = vld [vmem:[%s13] sm:$0x1]
        %v1022 = vsel %vm537, %v1019, 0.0
        %1023 = vadd.xlane.f32.xlu0 %v1022
        %v1024 = vpop.xlane.xlu0 %1023
        %v1025 = vmul.f32 %v1024, %v899
        %v1026 = vsub.f32 %v1019, %v1025
        %v1027 = vmul.f32 %v1026, %v1026
        %v1028 = vsel %vm537, %v1027, 0.0
        %1029 = vadd.xlane.f32.xlu0 %v1028
        %v1030 = vpop.xlane.xlu0 %1029
        %v1031 = vmul.f32 %v1030, %v899
        %v1032 = vadd.f32 %v1031, 1e-05
        %v1033 = vrsqrt.pop %v1032
        %v1034 = vmul.f32 %v1033, %v1032
        %v1035 = vmul.f32 %v1034, %v1033
        %v1036 = vmul.f32 0.5, %v1035
        %v1037 = vsub.f32 1.5, %v1036
        %v1038 = vmul.f32 %v1033, %v1037
        %vm1039 = vweird.f32 %v1032
        %vm1040 = vweird.f32 %v1033
        %vm1041 = vmor %vm1039, %vm1040
        %v1042 = vsel %vm1041, %v1033, %v1038
        %v1043 = vmul.f32 %v1026, %v1042
        %v1045 = vperm.slane %v1020, 0
        %v1047 = vmul.f32 %v1043, %v1045
        %v1049 = vperm.slane %v1021, 0
        %v1051 = vadd.f32 %v1047, %v1049
        %1052 = vst.msk [vmem:[%s505] sm:$0xff] %vm537, %v1051
        %s1053 = sand.u32 %s342, 1
        %s1054 = scalar_lea.sflag [#allocation4], %s1053
        %s1055 = sand.u32 %s342, 1
        %s1056 = smul.addr %s1055, 8
        %s1057 = scalar_lea.vmem [#allocation7], %s1056
        // Predicated region
        $region85: #{tpu_custom_call.1} parent=75 // pred_check
          %p1058 = pneg %p352
        $region86: #{tpu_custom_call.1} parent=75 // pred_check_branch
          %1060 = sbr.rel (%p1058) target = $region88
        $region87: #{tpu_custom_call.1} parent=75 // pred_region
          %1062 = vsyncadd %s1054, 0
          %s1063 = smul.addr %s30, 8
          %s1064 = scalar_lea.hbm %s14, %s1063
          %s1066 = sshll.u32 %s1057, 4
          %s1067 = int_to_ptr.vmem [resolvable:$true] %s1066
          %s1068 = sshll.u32 %s1064, 4
          %s1069 = int_to_ptr.hbm [resolvable:$true] %s1068
          %1071 = dma.vmem_to_hbm [thread:$0]  %s1067, 128, %s1069, %s1054
        $region88: #{tpu_custom_call.1} parent=75 // pred_fallthru
          _
      $region76: #{tpu_custom_call.1} parent=5 // pred_fallthru
        _
      %p1072 = scmp.le.s32.totalorder 2, %s25
      // Predicated region
      $region89: #{tpu_custom_call.1} parent=5 // pred_check
        %p1073 = pneg %p1072
      $region90: #{tpu_custom_call.1} parent=5 // pred_check_branch
        %1075 = sbr.rel (%p1073) target = $region92
      $region91: #{tpu_custom_call.1} parent=5 // pred_region
        %s1076 = ssub.s32 %s25, 2
        // Predicated region
        $region93: #{tpu_custom_call.1} parent=91 // pred_check
          %p1077 = pneg %p358
        $region94: #{tpu_custom_call.1} parent=91 // pred_check_branch
          %1079 = sbr.rel (%p1077) target = $region96
        $region95: #{tpu_custom_call.1} parent=91 // pred_region
          %s1080 = sand.u32 %s343, 1
          %s1081 = scalar_lea.sflag [#allocation4], %s1080
          %s1082 = sand.u32 %s343, 1
          %s1083 = smul.addr %s1082, 8
          %s1084 = scalar_lea.vmem [#allocation7], %s1083
          %1086 = dma.done %s1081, 128
        $region96: #{tpu_custom_call.1} parent=91 // pred_fallthru
          _
      $region92: #{tpu_custom_call.1} parent=5 // pred_fallthru
        _
    $region6: #{tpu_custom_call.1} parent=1 // loop_footer
      %s29 = sadd.s32 1, %s25
    $region7: #{tpu_custom_call.1} parent=1 // loop_footer_branch
      %24 = sbr.rel target = $region3
    $region8: #{tpu_custom_call.1} parent=1 // loop_exit
      _
    %1087 = vsyncpa [#allocation3], 1
    %s1088 = scalar_lea.sflag [#allocation3], 1
    %1089 = vsyncpa %s1088, 1
    %1090 = vsyncpa [#allocation6], 1
    %1091 = vsyncpa [#allocation4], 1
    %s1092 = scalar_lea.sflag [#allocation4], 1
    %1093 = vsyncpa %s1092, 1

</llo_original>
